<compile_context>
chip_gen: v7x
topology: tpu7x:2x2x1
jax: 0.10.0
libtpu: 0.0.40
codegen_flags: <defaults>
</compile_context>

<pallas_src>
import numpy as np
import jax
import jax.numpy as jnp
from jax.experimental import pallas as pl
from jax.experimental.pallas import tpu as pltpu


# --------------------------------------------------------------------------
# Host-side builders: conv -> (V, B, shift) matmul form
# --------------------------------------------------------------------------
def _build_v(h_out, h_in, dh, stride, pad):
    v = np.zeros((h_out, h_in), np.float32)
    for ho in range(h_out):
        hi = stride * ho + dh - pad
        if 0 <= hi < h_in:
            v[ho, hi] = 1.0
    return v


def _build_b(w_out, w_in, cin, cout, w_tap, stride, pad, dilation, scale):
    # w_tap: (kw, cin, cout) weights of one vertical tap; BN scale folded in.
    kw = w_tap.shape[0]
    b = np.zeros((w_in * cin, w_out * cout), np.float32)
    for wo in range(w_out):
        for dw in range(kw):
            wi = stride * wo + dw * dilation - pad
            if 0 <= wi < w_in:
                b[wi * cin:(wi + 1) * cin, wo * cout:(wo + 1) * cout] += (
                    w_tap[dw] * scale[None, :])
    return b


def _build_stage(cp, h_in, w_in, stride=1, dilation=1, act="relu"):
    w = np.asarray(cp["w"], np.float32)
    kh, kw, cin, cout = w.shape
    scale = np.asarray(cp.get("scale", np.ones((cout,), np.float32)), np.float32)
    shift = np.asarray(cp.get("shift", np.zeros((cout,), np.float32)), np.float32)
    pad_h = (kh - 1) // 2 * dilation
    pad_w = (kw - 1) // 2 * dilation
    h_out = (h_in + 2 * pad_h - dilation * (kh - 1) - 1) // stride + 1
    w_out = (w_in + 2 * pad_w - dilation * (kw - 1) - 1) // stride + 1

    identity = (np.eye(h_out, h_in, dtype=np.float32)
                if (stride == 1 and h_out == h_in) else None)
    v_list, b_list, use_v = [], [], []
    for t in range(kh):
        dh = t * dilation
        v = _build_v(h_out, h_in, dh, stride, pad_h)
        b = _build_b(w_out, w_in, cin, cout, w[t], stride, pad_w, dilation, scale)
        if not v.any() or not b.any():
            continue  # tap never touches the (zero-padded) input at this size
        v_list.append(v)
        b_list.append(b)
        use_v.append(not (identity is not None and np.array_equal(v, identity)))

    arrays = (
        jnp.asarray(np.stack(v_list), jnp.bfloat16),
        jnp.asarray(np.stack(b_list), jnp.bfloat16),
        jnp.asarray(np.tile(shift, w_out)[None, :], jnp.float32),
    )
    spec = {"n_taps": len(v_list), "use_v": tuple(use_v), "act": act}
    return spec, arrays, (h_out, w_out, cout)


# --------------------------------------------------------------------------
# Pallas kernels (one fused kernel per bottleneck block)
# --------------------------------------------------------------------------
def _apply_stages(x_f32, stage_specs, refs):
    """Run the right branch: sequence of ConvBN(+ReLU) stages, all in VMEM."""
    cur = x_f32
    for si, spec in enumerate(stage_specs):
        v_ref, b_ref, s_ref = refs[3 * si], refs[3 * si + 1], refs[3 * si + 2]
        cur_b = cur.astype(jnp.bfloat16)
        acc = None
        for t in range(spec["n_taps"]):
            if spec["use_v"][t]:
                row = jnp.dot(v_ref[t], cur_b,
                              preferred_element_type=jnp.float32
                              ).astype(jnp.bfloat16)
            else:
                row = cur_b
            part = jnp.dot(row, b_ref[t], preferred_element_type=jnp.float32)
            acc = part if acc is None else acc + part
        y = acc + s_ref[...]
        if spec["act"] == "relu":
            y = jnp.maximum(y, 0.0)
        cur = y
    return cur


def make_residual_kernel(stage_specs):
    n = len(stage_specs)

    def kernel(x_ref, *refs):
        out_ref = refs[-1]
        alpha_ref = refs[-2]
        x = x_ref[...]                                  # (H, W*C) f32
        right = _apply_stages(x, stage_specs, refs[:3 * n])
        y = x + right                                   # residual add
        a = alpha_ref[0, 0]
        out_ref[...] = jnp.where(y >= 0.0, y, a * y)    # PReLU (scalar alpha)

    return kernel


def make_downsample_kernel(stage_specs):
    n = len(stage_specs)

    def kernel(x_ref, *refs):
        out_ref = refs[-1]
        alpha_ref = refs[-2]
        ve_ref, vo_ref, se_ref, so_ref, bl_ref, sl_ref = refs[3 * n:3 * n + 6]
        x = x_ref[...]                                  # (H, W*Cin) f32
        # right branch: 3x3/s2 -> 3x3 -> conv1x1
        right = _apply_stages(x, stage_specs, refs[:3 * n])
        # left branch: MaxPool2d(2,2) + ConvBNReLU 1x1, all via selection matmuls
        xb = x.astype(jnp.bfloat16)
        r_e = jnp.dot(ve_ref[...], xb, preferred_element_type=jnp.float32)
        r_o = jnp.dot(vo_ref[...], xb, preferred_element_type=jnp.float32)
        vmax = jnp.maximum(r_e, r_o).astype(jnp.bfloat16)        # (H/2, W*Cin)
        h_e = jnp.dot(vmax, se_ref[...], preferred_element_type=jnp.float32)
        h_o = jnp.dot(vmax, so_ref[...], preferred_element_type=jnp.float32)
        pooled = jnp.maximum(h_e, h_o).astype(jnp.bfloat16)      # (H/2, W/2*Cin)
        left = jnp.dot(pooled, bl_ref[...],
                       preferred_element_type=jnp.float32) + sl_ref[...]
        left = jnp.maximum(left, 0.0)
        y = left + right
        a = alpha_ref[0, 0]
        out_ref[...] = jnp.where(y >= 0.0, y, a * y)

    return kernel


def run_block(x_slab, block):
    n, h_in, wc_in = x_slab.shape
    assert h_in == block["h_in"] and wc_in == block["wc_in"]
    h_out, wc_out = block["h_out"], block["wc_out"]

    inputs = [x_slab]
    in_specs = [pl.BlockSpec((None, h_in, wc_in), lambda i: (i, 0, 0))]

    def add_full(arr):
        inputs.append(arr)
        if arr.ndim == 3:
            in_specs.append(pl.BlockSpec(arr.shape, lambda i: (0, 0, 0)))
        else:
            in_specs.append(pl.BlockSpec(arr.shape, lambda i: (0, 0)))

    for (v, b, s) in block["arrays"]:
        add_full(v); add_full(b); add_full(s)

    if block["kind"] == "downsample":
        for arr in block["pool"]:
            add_full(arr)
        kernel = make_downsample_kernel(block["specs"])
    else:
        kernel = make_residual_kernel(block["specs"])

    inputs.append(block["alpha"])
    in_specs.append(pl.BlockSpec(memory_space=pltpu.MemorySpace.SMEM))

    return pl.pallas_call(
        kernel,
        out_shape=jax.ShapeDtypeStruct((n, h_out, wc_out), jnp.float32),
        grid=(n,),
        in_specs=in_specs,
        out_specs=pl.BlockSpec((None, h_out, wc_out), lambda i: (i, 0, 0)),
        compiler_params=pltpu.CompilerParams(dimension_semantics=("parallel",)),
    )(*inputs)


# --------------------------------------------------------------------------
# Parameter init (deterministic, synthetic) & block construction
# --------------------------------------------------------------------------
class _KeyGen:
    def __init__(self, key):
        self.key = key

    def __call__(self):
        self.key, sub = jax.random.split(self.key)
        return sub


def _make_convbn(kg, kh, kw, cin, cout):
    w = jax.random.normal(kg(), (kh, kw, cin, cout), jnp.float32) * 0.1
    gamma = jax.random.uniform(kg(), (cout,), jnp.float32, 0.5, 1.5)
    beta = jax.random.normal(kg(), (cout,), jnp.float32) * 0.1
    mean = jax.random.normal(kg(), (cout,), jnp.float32) * 0.1
    var = jax.random.uniform(kg(), (cout,), jnp.float32, 0.5, 1.5)
    scale = gamma / jnp.sqrt(var + 1e-5)         # inference-mode BN fold
    shift = beta - mean * scale
    return {"w": np.asarray(w), "scale": np.asarray(scale),
            "shift": np.asarray(shift)}


def _make_conv1x1(kg, cin, cout):
    return np.asarray(jax.random.normal(kg(), (1, 1, cin, cout), jnp.float32) * 0.1)


def build_residual_block(kg, conv_type, ch, h, w, dilation=1):
    hid = int(ch * 0.25)
    if conv_type in ("regular", "dilate"):
        convs = [(_make_convbn(kg, 1, 1, ch, hid), 1, 1),
                 (_make_convbn(kg, 3, 3, hid, hid), 1, dilation)]
    elif conv_type == "asymmetric":
        convs = [(_make_convbn(kg, 1, 1, ch, hid), 1, 1),
                 (_make_convbn(kg, 5, 1, hid, hid), 1, 1),
                 (_make_convbn(kg, 1, 5, hid, hid), 1, 1)]
    else:
        raise ValueError(conv_type)
    last = {"w": _make_conv1x1(kg, hid, ch)}          # conv1x1, no BN/bias
    alpha = jnp.full((1, 1), 0.25, jnp.float32)       # PReLU default init

    specs, arrays = [], []
    hh, ww = h, w
    for cp, stride, dil in convs:
        spec, arrs, (hh, ww, _) = _build_stage(cp, hh, ww, stride, dil, act="relu")
        specs.append(spec); arrays.append(arrs)
    spec, arrs, (hh, ww, cc) = _build_stage(last, hh, ww, 1, 1, act="none")
    specs.append(spec); arrays.append(arrs)
    assert (hh, ww * cc) == (h, w * ch)
    return {"kind": "residual", "specs": specs, "arrays": arrays, "alpha": alpha,
            "h_in": h, "wc_in": w * ch, "h_out": h, "wc_out": w * ch}


def build_downsample_block(kg, cin, cout, h, w):
    hid = int(cin * 0.25)
    rc1 = _make_convbn(kg, 3, 3, cin, hid)            # 3x3 stride 2
    rc2 = _make_convbn(kg, 3, 3, hid, hid)
    last = {"w": _make_conv1x1(kg, hid, cout)}
    left = _make_convbn(kg, 1, 1, cin, cout)          # 1x1 on pooled input
    alpha = jnp.full((1, 1), 0.25, jnp.float32)

    specs, arrays = [], []
    spec, arrs, (hh, ww, _) = _build_stage(rc1, h, w, stride=2, dilation=1, act="relu")
    specs.append(spec); arrays.append(arrs)
    spec, arrs, (hh, ww, _) = _build_stage(rc2, hh, ww, 1, 1, act="relu")
    specs.append(spec); arrays.append(arrs)
    spec, arrs, (hh, ww, cc) = _build_stage(last, hh, ww, 1, 1, act="none")
    specs.append(spec); arrays.append(arrs)

    h_out, w_out = h // 2, w // 2
    assert (hh, ww, cc) == (h_out, w_out, cout)

    # maxpool 2x2 selection matrices (rows / lanes), then folded 1x1 ConvBN
    v_even = np.zeros((h_out, h), np.float32)
    v_odd = np.zeros((h_out, h), np.float32)
    for ho in range(h_out):
        v_even[ho, 2 * ho] = 1.0
        v_odd[ho, 2 * ho + 1] = 1.0
    s_even = np.zeros((w * cin, w_out * cin), np.float32)
    s_odd = np.zeros((w * cin, w_out * cin), np.float32)
    for wo in range(w_out):
        for c in range(cin):
            s_even[(2 * wo) * cin + c, wo * cin + c] = 1.0
            s_odd[(2 * wo + 1) * cin + c, wo * cin + c] = 1.0
    lw = left["w"][0, 0]                              # (cin, cout)
    b_left = np.zeros((w_out * cin, w_out * cout), np.float32)
    for wo in range(w_out):
        b_left[wo * cin:(wo + 1) * cin, wo * cout:(wo + 1) * cout] = (
            lw * left["scale"][None, :])
    shift_left = np.tile(left["shift"], w_out)[None, :]

    pool = (jnp.asarray(v_even, jnp.bfloat16), jnp.asarray(v_odd, jnp.bfloat16),
            jnp.asarray(s_even, jnp.bfloat16), jnp.asarray(s_odd, jnp.bfloat16),
            jnp.asarray(b_left, jnp.bfloat16), jnp.asarray(shift_left, jnp.float32))
    return {"kind": "downsample", "specs": specs, "arrays": arrays, "pool": pool,
            "alpha": alpha, "h_in": h, "wc_in": w * cin,
            "h_out": h_out, "wc_out": w_out * cout}


def make_bottleneck23(kg, in_ch, out_ch, h, w):
    blocks = [build_downsample_block(kg, in_ch, out_ch, h, w)]
    h2, w2 = h // 2, w // 2
    reg_specs = [("regular", 1), ("dilate", 2), ("asymmetric", 1), ("dilate", 4),
                 ("regular", 1), ("dilate", 8), ("asymmetric", 1), ("dilate", 16)]
    for (t, d) in reg_specs:
        blocks.append(build_residual_block(kg, t, out_ch, h2, w2, d))
    return blocks


# --------------------------------------------------------------------------
# Forward (mirrors ModifiedBottleNeck23, eval mode)
# --------------------------------------------------------------------------
def bottleneck23_forward(x_slab, blocks):
    x = run_block(x_slab, blocks[0])        # downsampling bottleneck
    for blk in blocks[1:]:
        x = run_block(x, blk)               # regular / dilate / asymmetric
    return x, None                          # indices is always None (as in ref)


# --------------------------------------------------------------------------
if __name__ == "__main__":
    kg = _KeyGen(jax.random.PRNGKey(0))

    in_ch, out_ch = 8, 16
    N, H, W = 2, 16, 16

    blocks = make_bottleneck23(kg, in_ch, out_ch, H, W)

    # PyTorch-style NCHW input -> NHWC -> lane-dense slab (N, H, W*C = 128)
    x_nchw = jax.random.normal(kg(), (N, in_ch, H, W), jnp.float32)
    x_slab = jnp.transpose(x_nchw, (0, 2, 3, 1)).reshape(N, H, W * in_ch)

    y_slab, indices = bottleneck23_forward(x_slab, blocks)
    y_slab = jax.block_until_ready(y_slab)

    y_nchw = jnp.transpose(y_slab.reshape(N, H // 2, W // 2, out_ch), (0, 3, 1, 2))
    assert y_nchw.shape == (N, out_ch, H // 2, W // 2), y_nchw.shape
    assert indices is None
    assert bool(jnp.all(jnp.isfinite(y_nchw)))
    print("KERNEL_OK")
</pallas_src>

<mosaic_0001>
module attributes {stable_mosaic.version = 11 : i64} {
  func.func @kernel(%arg0: i32, %arg1: memref<1x16x128xf32, #tpu.memory_space<vmem>>, %arg2: memref<3x8x16xbf16, #tpu.memory_space<vmem>>, %arg3: memref<3x128x16xbf16, #tpu.memory_space<vmem>>, %arg4: memref<1x16xf32, #tpu.memory_space<vmem>>, %arg5: memref<3x8x8xbf16, #tpu.memory_space<vmem>>, %arg6: memref<3x16x16xbf16, #tpu.memory_space<vmem>>, %arg7: memref<1x16xf32, #tpu.memory_space<vmem>>, %arg8: memref<1x8x8xbf16, #tpu.memory_space<vmem>>, %arg9: memref<1x16x128xbf16, #tpu.memory_space<vmem>>, %arg10: memref<1x128xf32, #tpu.memory_space<vmem>>, %arg11: memref<8x16xbf16, #tpu.memory_space<vmem>>, %arg12: memref<8x16xbf16, #tpu.memory_space<vmem>>, %arg13: memref<128x64xbf16, #tpu.memory_space<vmem>>, %arg14: memref<128x64xbf16, #tpu.memory_space<vmem>>, %arg15: memref<64x128xbf16, #tpu.memory_space<vmem>>, %arg16: memref<1x128xf32, #tpu.memory_space<vmem>>, %arg17: memref<1x1xf32, #tpu.memory_space<smem>>, %arg18: memref<1x8x128xf32, #tpu.memory_space<vmem>>) attributes {dimension_semantics = [#tpu.dimension_semantics<parallel>], iteration_bounds = array<i64: 2>, scalar_prefetch = 0 : i64, scratch_operands = 0 : i64, tpu.core_type = #tpu.core_type<tc>, window_params = [{transform_indices = @transform_0, window_bounds = array<i64: 1, 16, 128>}, {pipeline_mode = #tpu.pipeline_mode<synchronous>, transform_indices = @transform_1, window_bounds = array<i64: 3, 8, 16>}, {pipeline_mode = #tpu.pipeline_mode<synchronous>, transform_indices = @transform_2, window_bounds = array<i64: 3, 128, 16>}, {pipeline_mode = #tpu.pipeline_mode<synchronous>, transform_indices = @transform_3, window_bounds = array<i64: 1, 16>}, {pipeline_mode = #tpu.pipeline_mode<synchronous>, transform_indices = @transform_4, window_bounds = array<i64: 3, 8, 8>}, {pipeline_mode = #tpu.pipeline_mode<synchronous>, transform_indices = @transform_5, window_bounds = array<i64: 3, 16, 16>}, {pipeline_mode = #tpu.pipeline_mode<synchronous>, transform_indices = @transform_6, window_bounds = array<i64: 1, 16>}, {pipeline_mode = #tpu.pipeline_mode<synchronous>, transform_indices = @transform_7, window_bounds = array<i64: 1, 8, 8>}, {pipeline_mode = #tpu.pipeline_mode<synchronous>, transform_indices = @transform_8, window_bounds = array<i64: 1, 16, 128>}, {pipeline_mode = #tpu.pipeline_mode<synchronous>, transform_indices = @transform_9, window_bounds = array<i64: 1, 128>}, {pipeline_mode = #tpu.pipeline_mode<synchronous>, transform_indices = @transform_10, window_bounds = array<i64: 8, 16>}, {pipeline_mode = #tpu.pipeline_mode<synchronous>, transform_indices = @transform_11, window_bounds = array<i64: 8, 16>}, {pipeline_mode = #tpu.pipeline_mode<synchronous>, transform_indices = @transform_12, window_bounds = array<i64: 128, 64>}, {pipeline_mode = #tpu.pipeline_mode<synchronous>, transform_indices = @transform_13, window_bounds = array<i64: 128, 64>}, {pipeline_mode = #tpu.pipeline_mode<synchronous>, transform_indices = @transform_14, window_bounds = array<i64: 64, 128>}, {pipeline_mode = #tpu.pipeline_mode<synchronous>, transform_indices = @transform_15, window_bounds = array<i64: 1, 128>}, {transform_indices = @transform_16, window_bounds = array<i64: 1, 1>}, {transform_indices = @transform_17, window_bounds = array<i64: 1, 8, 128>}]} {
    %c0 = arith.constant 0 : index
    %c0_0 = arith.constant 0 : index
    %c0_1 = arith.constant 0 : index
    %0 = vector.load %arg1[%c0, %c0_0, %c0_1] : memref<1x16x128xf32, #tpu.memory_space<vmem>>, vector<1x16x128xf32>
    %1 = vector.shape_cast %0 : vector<1x16x128xf32> to vector<16x128xf32>
    %2 = arith.truncf %1 : vector<16x128xf32> to vector<16x128xbf16>
    %c0_2 = arith.constant 0 : index
    %c0_3 = arith.constant 0 : index
    %c0_4 = arith.constant 0 : index
    %3 = vector.load %arg2[%c0_2, %c0_3, %c0_4] : memref<3x8x16xbf16, #tpu.memory_space<vmem>>, vector<1x8x16xbf16>
    %4 = vector.shape_cast %3 : vector<1x8x16xbf16> to vector<8x16xbf16>
    %cst = arith.constant dense<0.000000e+00> : vector<8x128xf32>
    %5 = tpu.matmul %4, %2, %cst {dimension_numbers = #tpu.dot_dimension_numbers<[1], [0], [0], [1], [0, 0, 1, 1], [], []>} : vector<8x16xbf16>, vector<16x128xbf16>, vector<8x128xf32> -> vector<8x128xf32>
    %6 = arith.truncf %5 : vector<8x128xf32> to vector<8x128xbf16>
    %c0_5 = arith.constant 0 : index
    %c0_6 = arith.constant 0 : index
    %c0_7 = arith.constant 0 : index
    %7 = vector.load %arg3[%c0_5, %c0_6, %c0_7] : memref<3x128x16xbf16, #tpu.memory_space<vmem>>, vector<1x128x16xbf16>
    %8 = vector.shape_cast %7 : vector<1x128x16xbf16> to vector<128x16xbf16>
    %cst_8 = arith.constant dense<0.000000e+00> : vector<8x16xf32>
    %9 = tpu.matmul %6, %8, %cst_8 {dimension_numbers = #tpu.dot_dimension_numbers<[1], [0], [0], [1], [0, 0, 1, 1], [], []>} : vector<8x128xbf16>, vector<128x16xbf16>, vector<8x16xf32> -> vector<8x16xf32>
    %c1 = arith.constant 1 : index
    %c0_9 = arith.constant 0 : index
    %c0_10 = arith.constant 0 : index
    %10 = vector.load %arg2[%c1, %c0_9, %c0_10] : memref<3x8x16xbf16, #tpu.memory_space<vmem>>, vector<1x8x16xbf16>
    %11 = vector.shape_cast %10 : vector<1x8x16xbf16> to vector<8x16xbf16>
    %cst_11 = arith.constant dense<0.000000e+00> : vector<8x128xf32>
    %12 = tpu.matmul %11, %2, %cst_11 {dimension_numbers = #tpu.dot_dimension_numbers<[1], [0], [0], [1], [0, 0, 1, 1], [], []>} : vector<8x16xbf16>, vector<16x128xbf16>, vector<8x128xf32> -> vector<8x128xf32>
    %13 = arith.truncf %12 : vector<8x128xf32> to vector<8x128xbf16>
    %c1_12 = arith.constant 1 : index
    %c0_13 = arith.constant 0 : index
    %c0_14 = arith.constant 0 : index
    %14 = vector.load %arg3[%c1_12, %c0_13, %c0_14] : memref<3x128x16xbf16, #tpu.memory_space<vmem>>, vector<1x128x16xbf16>
    %15 = vector.shape_cast %14 : vector<1x128x16xbf16> to vector<128x16xbf16>
    %cst_15 = arith.constant dense<0.000000e+00> : vector<8x16xf32>
    %16 = tpu.matmul %13, %15, %cst_15 {dimension_numbers = #tpu.dot_dimension_numbers<[1], [0], [0], [1], [0, 0, 1, 1], [], []>} : vector<8x128xbf16>, vector<128x16xbf16>, vector<8x16xf32> -> vector<8x16xf32>
    %17 = arith.addf %9, %16 : vector<8x16xf32>
    %c2 = arith.constant 2 : index
    %c0_16 = arith.constant 0 : index
    %c0_17 = arith.constant 0 : index
    %18 = vector.load %arg2[%c2, %c0_16, %c0_17] : memref<3x8x16xbf16, #tpu.memory_space<vmem>>, vector<1x8x16xbf16>
    %19 = vector.shape_cast %18 : vector<1x8x16xbf16> to vector<8x16xbf16>
    %cst_18 = arith.constant dense<0.000000e+00> : vector<8x128xf32>
    %20 = tpu.matmul %19, %2, %cst_18 {dimension_numbers = #tpu.dot_dimension_numbers<[1], [0], [0], [1], [0, 0, 1, 1], [], []>} : vector<8x16xbf16>, vector<16x128xbf16>, vector<8x128xf32> -> vector<8x128xf32>
    %21 = arith.truncf %20 : vector<8x128xf32> to vector<8x128xbf16>
    %c2_19 = arith.constant 2 : index
    %c0_20 = arith.constant 0 : index
    %c0_21 = arith.constant 0 : index
    %22 = vector.load %arg3[%c2_19, %c0_20, %c0_21] : memref<3x128x16xbf16, #tpu.memory_space<vmem>>, vector<1x128x16xbf16>
    %23 = vector.shape_cast %22 : vector<1x128x16xbf16> to vector<128x16xbf16>
    %cst_22 = arith.constant dense<0.000000e+00> : vector<8x16xf32>
    %24 = tpu.matmul %21, %23, %cst_22 {dimension_numbers = #tpu.dot_dimension_numbers<[1], [0], [0], [1], [0, 0, 1, 1], [], []>} : vector<8x128xbf16>, vector<128x16xbf16>, vector<8x16xf32> -> vector<8x16xf32>
    %25 = arith.addf %17, %24 : vector<8x16xf32>
    %c0_23 = arith.constant 0 : index
    %c0_24 = arith.constant 0 : index
    %26 = vector.load %arg4[%c0_23, %c0_24] : memref<1x16xf32, #tpu.memory_space<vmem>>, vector<1x16xf32>
    %27 = vector.broadcast %26 : vector<1x16xf32> to vector<8x16xf32>
    %28 = arith.addf %25, %27 : vector<8x16xf32>
    %cst_25 = arith.constant 0.000000e+00 : f32
    %29 = vector.broadcast %cst_25 : f32 to vector<8x16xf32>
    %30 = arith.maximumf %28, %29 : vector<8x16xf32>
    %31 = arith.truncf %30 : vector<8x16xf32> to vector<8x16xbf16>
    %c0_26 = arith.constant 0 : index
    %c0_27 = arith.constant 0 : index
    %c0_28 = arith.constant 0 : index
    %32 = vector.load %arg5[%c0_26, %c0_27, %c0_28] : memref<3x8x8xbf16, #tpu.memory_space<vmem>>, vector<1x8x8xbf16>
    %33 = vector.shape_cast %32 : vector<1x8x8xbf16> to vector<8x8xbf16>
    %cst_29 = arith.constant dense<0.000000e+00> : vector<8x16xf32>
    %34 = tpu.matmul %33, %31, %cst_29 {dimension_numbers = #tpu.dot_dimension_numbers<[1], [0], [0], [1], [0, 0, 1, 1], [], []>} : vector<8x8xbf16>, vector<8x16xbf16>, vector<8x16xf32> -> vector<8x16xf32>
    %35 = arith.truncf %34 : vector<8x16xf32> to vector<8x16xbf16>
    %c0_30 = arith.constant 0 : index
    %c0_31 = arith.constant 0 : index
    %c0_32 = arith.constant 0 : index
    %36 = vector.load %arg6[%c0_30, %c0_31, %c0_32] : memref<3x16x16xbf16, #tpu.memory_space<vmem>>, vector<1x16x16xbf16>
    %37 = vector.shape_cast %36 : vector<1x16x16xbf16> to vector<16x16xbf16>
    %cst_33 = arith.constant dense<0.000000e+00> : vector<8x16xf32>
    %38 = tpu.matmul %35, %37, %cst_33 {dimension_numbers = #tpu.dot_dimension_numbers<[1], [0], [0], [1], [0, 0, 1, 1], [], []>} : vector<8x16xbf16>, vector<16x16xbf16>, vector<8x16xf32> -> vector<8x16xf32>
    %c1_34 = arith.constant 1 : index
    %c0_35 = arith.constant 0 : index
    %c0_36 = arith.constant 0 : index
    %39 = vector.load %arg6[%c1_34, %c0_35, %c0_36] : memref<3x16x16xbf16, #tpu.memory_space<vmem>>, vector<1x16x16xbf16>
    %40 = vector.shape_cast %39 : vector<1x16x16xbf16> to vector<16x16xbf16>
    %cst_37 = arith.constant dense<0.000000e+00> : vector<8x16xf32>
    %41 = tpu.matmul %31, %40, %cst_37 {dimension_numbers = #tpu.dot_dimension_numbers<[1], [0], [0], [1], [0, 0, 1, 1], [], []>} : vector<8x16xbf16>, vector<16x16xbf16>, vector<8x16xf32> -> vector<8x16xf32>
    %42 = arith.addf %38, %41 : vector<8x16xf32>
    %c2_38 = arith.constant 2 : index
    %c0_39 = arith.constant 0 : index
    %c0_40 = arith.constant 0 : index
    %43 = vector.load %arg5[%c2_38, %c0_39, %c0_40] : memref<3x8x8xbf16, #tpu.memory_space<vmem>>, vector<1x8x8xbf16>
    %44 = vector.shape_cast %43 : vector<1x8x8xbf16> to vector<8x8xbf16>
    %cst_41 = arith.constant dense<0.000000e+00> : vector<8x16xf32>
    %45 = tpu.matmul %44, %31, %cst_41 {dimension_numbers = #tpu.dot_dimension_numbers<[1], [0], [0], [1], [0, 0, 1, 1], [], []>} : vector<8x8xbf16>, vector<8x16xbf16>, vector<8x16xf32> -> vector<8x16xf32>
    %46 = arith.truncf %45 : vector<8x16xf32> to vector<8x16xbf16>
    %c2_42 = arith.constant 2 : index
    %c0_43 = arith.constant 0 : index
    %c0_44 = arith.constant 0 : index
    %47 = vector.load %arg6[%c2_42, %c0_43, %c0_44] : memref<3x16x16xbf16, #tpu.memory_space<vmem>>, vector<1x16x16xbf16>
    %48 = vector.shape_cast %47 : vector<1x16x16xbf16> to vector<16x16xbf16>
    %cst_45 = arith.constant dense<0.000000e+00> : vector<8x16xf32>
    %49 = tpu.matmul %46, %48, %cst_45 {dimension_numbers = #tpu.dot_dimension_numbers<[1], [0], [0], [1], [0, 0, 1, 1], [], []>} : vector<8x16xbf16>, vector<16x16xbf16>, vector<8x16xf32> -> vector<8x16xf32>
    %50 = arith.addf %42, %49 : vector<8x16xf32>
    %c0_46 = arith.constant 0 : index
    %c0_47 = arith.constant 0 : index
    %51 = vector.load %arg7[%c0_46, %c0_47] : memref<1x16xf32, #tpu.memory_space<vmem>>, vector<1x16xf32>
    %52 = vector.broadcast %51 : vector<1x16xf32> to vector<8x16xf32>
    %53 = arith.addf %50, %52 : vector<8x16xf32>
    %cst_48 = arith.constant 0.000000e+00 : f32
    %54 = vector.broadcast %cst_48 : f32 to vector<8x16xf32>
    %55 = arith.maximumf %53, %54 : vector<8x16xf32>
    %56 = arith.truncf %55 : vector<8x16xf32> to vector<8x16xbf16>
    %c0_49 = arith.constant 0 : index
    %c0_50 = arith.constant 0 : index
    %c0_51 = arith.constant 0 : index
    %57 = vector.load %arg9[%c0_49, %c0_50, %c0_51] : memref<1x16x128xbf16, #tpu.memory_space<vmem>>, vector<1x16x128xbf16>
    %58 = vector.shape_cast %57 : vector<1x16x128xbf16> to vector<16x128xbf16>
    %cst_52 = arith.constant dense<0.000000e+00> : vector<8x128xf32>
    %59 = tpu.matmul %56, %58, %cst_52 {dimension_numbers = #tpu.dot_dimension_numbers<[1], [0], [0], [1], [0, 0, 1, 1], [], []>} : vector<8x16xbf16>, vector<16x128xbf16>, vector<8x128xf32> -> vector<8x128xf32>
    %c0_53 = arith.constant 0 : index
    %c0_54 = arith.constant 0 : index
    %60 = vector.load %arg10[%c0_53, %c0_54] : memref<1x128xf32, #tpu.memory_space<vmem>>, vector<1x128xf32>
    %61 = vector.broadcast %60 : vector<1x128xf32> to vector<8x128xf32>
    %62 = arith.addf %59, %61 : vector<8x128xf32>
    %63 = arith.truncf %1 : vector<16x128xf32> to vector<16x128xbf16>
    %c0_55 = arith.constant 0 : index
    %c0_56 = arith.constant 0 : index
    %64 = vector.load %arg11[%c0_55, %c0_56] : memref<8x16xbf16, #tpu.memory_space<vmem>>, vector<8x16xbf16>
    %cst_57 = arith.constant dense<0.000000e+00> : vector<8x128xf32>
    %65 = tpu.matmul %64, %63, %cst_57 {dimension_numbers = #tpu.dot_dimension_numbers<[1], [0], [0], [1], [0, 0, 1, 1], [], []>} : vector<8x16xbf16>, vector<16x128xbf16>, vector<8x128xf32> -> vector<8x128xf32>
    %c0_58 = arith.constant 0 : index
    %c0_59 = arith.constant 0 : index
    %66 = vector.load %arg12[%c0_58, %c0_59] : memref<8x16xbf16, #tpu.memory_space<vmem>>, vector<8x16xbf16>
    %cst_60 = arith.constant dense<0.000000e+00> : vector<8x128xf32>
    %67 = tpu.matmul %66, %63, %cst_60 {dimension_numbers = #tpu.dot_dimension_numbers<[1], [0], [0], [1], [0, 0, 1, 1], [], []>} : vector<8x16xbf16>, vector<16x128xbf16>, vector<8x128xf32> -> vector<8x128xf32>
    %68 = arith.maximumf %65, %67 : vector<8x128xf32>
    %69 = arith.truncf %68 : vector<8x128xf32> to vector<8x128xbf16>
    %c0_61 = arith.constant 0 : index
    %c0_62 = arith.constant 0 : index
    %70 = vector.load %arg13[%c0_61, %c0_62] : memref<128x64xbf16, #tpu.memory_space<vmem>>, vector<128x64xbf16>
    %cst_63 = arith.constant dense<0.000000e+00> : vector<8x64xf32>
    %71 = tpu.matmul %69, %70, %cst_63 {dimension_numbers = #tpu.dot_dimension_numbers<[1], [0], [0], [1], [0, 0, 1, 1], [], []>} : vector<8x128xbf16>, vector<128x64xbf16>, vector<8x64xf32> -> vector<8x64xf32>
    %c0_64 = arith.constant 0 : index
    %c0_65 = arith.constant 0 : index
    %72 = vector.load %arg14[%c0_64, %c0_65] : memref<128x64xbf16, #tpu.memory_space<vmem>>, vector<128x64xbf16>
    %cst_66 = arith.constant dense<0.000000e+00> : vector<8x64xf32>
    %73 = tpu.matmul %69, %72, %cst_66 {dimension_numbers = #tpu.dot_dimension_numbers<[1], [0], [0], [1], [0, 0, 1, 1], [], []>} : vector<8x128xbf16>, vector<128x64xbf16>, vector<8x64xf32> -> vector<8x64xf32>
    %74 = arith.maximumf %71, %73 : vector<8x64xf32>
    %75 = arith.truncf %74 : vector<8x64xf32> to vector<8x64xbf16>
    %c0_67 = arith.constant 0 : index
    %c0_68 = arith.constant 0 : index
    %76 = vector.load %arg15[%c0_67, %c0_68] : memref<64x128xbf16, #tpu.memory_space<vmem>>, vector<64x128xbf16>
    %cst_69 = arith.constant dense<0.000000e+00> : vector<8x128xf32>
    %77 = tpu.matmul %75, %76, %cst_69 {dimension_numbers = #tpu.dot_dimension_numbers<[1], [0], [0], [1], [0, 0, 1, 1], [], []>} : vector<8x64xbf16>, vector<64x128xbf16>, vector<8x128xf32> -> vector<8x128xf32>
    %c0_70 = arith.constant 0 : index
    %c0_71 = arith.constant 0 : index
    %78 = vector.load %arg16[%c0_70, %c0_71] : memref<1x128xf32, #tpu.memory_space<vmem>>, vector<1x128xf32>
    %79 = vector.broadcast %78 : vector<1x128xf32> to vector<8x128xf32>
    %80 = arith.addf %77, %79 : vector<8x128xf32>
    %cst_72 = arith.constant 0.000000e+00 : f32
    %81 = vector.broadcast %cst_72 : f32 to vector<8x128xf32>
    %82 = arith.maximumf %80, %81 : vector<8x128xf32>
    %83 = arith.addf %82, %62 : vector<8x128xf32>
    %c0_73 = arith.constant 0 : index
    %c0_74 = arith.constant 0 : index
    %84 = memref.load %arg17[%c0_73, %c0_74] : memref<1x1xf32, #tpu.memory_space<smem>>
    %cst_75 = arith.constant 0.000000e+00 : f32
    %85 = vector.broadcast %cst_75 : f32 to vector<8x128xf32>
    %86 = arith.cmpf oge, %83, %85 : vector<8x128xf32>
    %87 = vector.broadcast %84 : f32 to vector<8x128xf32>
    %88 = arith.mulf %87, %83 : vector<8x128xf32>
    %89 = arith.select %86, %83, %88 : vector<8x128xi1>, vector<8x128xf32>
    %c0_76 = arith.constant 0 : index
    %c0_77 = arith.constant 0 : index
    %c0_78 = arith.constant 0 : index
    %90 = vector.load %arg18[%c0_76, %c0_77, %c0_78] : memref<1x8x128xf32, #tpu.memory_space<vmem>>, vector<1x8x128xf32>
    %91 = vector.shape_cast %90 : vector<1x8x128xf32> to vector<8x128xf32>
    %92 = vector.shape_cast %89 : vector<8x128xf32> to vector<1x8x128xf32>
    tpu.vector_store %arg18[%c0_76, %c0_77, %c0_78], %92 {strides = array<i32>} : memref<1x8x128xf32, #tpu.memory_space<vmem>>, vector<1x8x128xf32>,
    return
  }
  func.func @transform_0(%arg0: i32) -> (i32, i32, i32) {
    %c0_i32 = arith.constant 0 : i32
    %c0_i32_0 = arith.constant 0 : i32
    %c0_i32_1 = arith.constant 0 : i32
    return %arg0, %c0_i32, %c0_i32_0 : i32, i32, i32
  }
  func.func @transform_1(%arg0: i32) -> (i32, i32, i32) {
    %c0_i32 = arith.constant 0 : i32
    %c0_i32_0 = arith.constant 0 : i32
    %c0_i32_1 = arith.constant 0 : i32
    %c0_i32_2 = arith.constant 0 : i32
    return %c0_i32, %c0_i32_0, %c0_i32_1 : i32, i32, i32
  }
  func.func @transform_2(%arg0: i32) -> (i32, i32, i32) {
    %c0_i32 = arith.constant 0 : i32
    %c0_i32_0 = arith.constant 0 : i32
    %c0_i32_1 = arith.constant 0 : i32
    %c0_i32_2 = arith.constant 0 : i32
    return %c0_i32, %c0_i32_0, %c0_i32_1 : i32, i32, i32
  }
  func.func @transform_3(%arg0: i32) -> (i32, i32) {
    %c0_i32 = arith.constant 0 : i32
    %c0_i32_0 = arith.constant 0 : i32
    %c0_i32_1 = arith.constant 0 : i32
    return %c0_i32, %c0_i32_0 : i32, i32
  }
  func.func @transform_4(%arg0: i32) -> (i32, i32, i32) {
    %c0_i32 = arith.constant 0 : i32
    %c0_i32_0 = arith.constant 0 : i32
    %c0_i32_1 = arith.constant 0 : i32
    %c0_i32_2 = arith.constant 0 : i32
    return %c0_i32, %c0_i32_0, %c0_i32_1 : i32, i32, i32
  }
  func.func @transform_5(%arg0: i32) -> (i32, i32, i32) {
    %c0_i32 = arith.constant 0 : i32
    %c0_i32_0 = arith.constant 0 : i32
    %c0_i32_1 = arith.constant 0 : i32
    %c0_i32_2 = arith.constant 0 : i32
    return %c0_i32, %c0_i32_0, %c0_i32_1 : i32, i32, i32
  }
  func.func @transform_6(%arg0: i32) -> (i32, i32) {
    %c0_i32 = arith.constant 0 : i32
    %c0_i32_0 = arith.constant 0 : i32
    %c0_i32_1 = arith.constant 0 : i32
    return %c0_i32, %c0_i32_0 : i32, i32
  }
  func.func @transform_7(%arg0: i32) -> (i32, i32, i32) {
    %c0_i32 = arith.constant 0 : i32
    %c0_i32_0 = arith.constant 0 : i32
    %c0_i32_1 = arith.constant 0 : i32
    %c0_i32_2 = arith.constant 0 : i32
    return %c0_i32, %c0_i32_0, %c0_i32_1 : i32, i32, i32
  }
  func.func @transform_8(%arg0: i32) -> (i32, i32, i32) {
    %c0_i32 = arith.constant 0 : i32
    %c0_i32_0 = arith.constant 0 : i32
    %c0_i32_1 = arith.constant 0 : i32
    %c0_i32_2 = arith.constant 0 : i32
    return %c0_i32, %c0_i32_0, %c0_i32_1 : i32, i32, i32
  }
  func.func @transform_9(%arg0: i32) -> (i32, i32) {
    %c0_i32 = arith.constant 0 : i32
    %c0_i32_0 = arith.constant 0 : i32
    %c0_i32_1 = arith.constant 0 : i32
    return %c0_i32, %c0_i32_0 : i32, i32
  }
  func.func @transform_10(%arg0: i32) -> (i32, i32) {
    %c0_i32 = arith.constant 0 : i32
    %c0_i32_0 = arith.constant 0 : i32
    %c0_i32_1 = arith.constant 0 : i32
    return %c0_i32, %c0_i32_0 : i32, i32
  }
  func.func @transform_11(%arg0: i32) -> (i32, i32) {
    %c0_i32 = arith.constant 0 : i32
    %c0_i32_0 = arith.constant 0 : i32
    %c0_i32_1 = arith.constant 0 : i32
    return %c0_i32, %c0_i32_0 : i32, i32
  }
  func.func @transform_12(%arg0: i32) -> (i32, i32) {
    %c0_i32 = arith.constant 0 : i32
    %c0_i32_0 = arith.constant 0 : i32
    %c0_i32_1 = arith.constant 0 : i32
    return %c0_i32, %c0_i32_0 : i32, i32
  }
  func.func @transform_13(%arg0: i32) -> (i32, i32) {
    %c0_i32 = arith.constant 0 : i32
    %c0_i32_0 = arith.constant 0 : i32
    %c0_i32_1 = arith.constant 0 : i32
    return %c0_i32, %c0_i32_0 : i32, i32
  }
  func.func @transform_14(%arg0: i32) -> (i32, i32) {
    %c0_i32 = arith.constant 0 : i32
    %c0_i32_0 = arith.constant 0 : i32
    %c0_i32_1 = arith.constant 0 : i32
    return %c0_i32, %c0_i32_0 : i32, i32
  }
  func.func @transform_15(%arg0: i32) -> (i32, i32) {
    %c0_i32 = arith.constant 0 : i32
    %c0_i32_0 = arith.constant 0 : i32
    %c0_i32_1 = arith.constant 0 : i32
    return %c0_i32, %c0_i32_0 : i32, i32
  }
  func.func @transform_16(%arg0: i32) -> (i32, i32) {
    %c0_i32 = arith.constant 0 : i32
    %c0_i32_0 = arith.constant 0 : i32
    %c0_i32_1 = arith.constant 0 : i32
    return %c0_i32, %c0_i32_0 : i32, i32
  }
  func.func @transform_17(%arg0: i32) -> (i32, i32, i32) {
    %c0_i32 = arith.constant 0 : i32
    %c0_i32_0 = arith.constant 0 : i32
    %c0_i32_1 = arith.constant 0 : i32
    return %arg0, %c0_i32, %c0_i32_0 : i32, i32, i32
  }
}

</mosaic_0001>

<llo_original>
// kernel: tpu_custom_call.1
$region0: #{tpu_custom_call.1}
  #allocation0 [shape = 'u32[]', space=smem, size = 0x4, offset = 0x4, fixed_abs, tag = 'smem constant byte address 0x4 - core index']
  #allocation1 [shape = 'u32[144,128]{1,0:T(1,128)}', space=vmem, size = 0x12000, scoped, tag = 'internal scratch']
  #allocation2 [shape = 'f32[1,1]{1,0:T(1,128)S(6)}', space=smem, size = 0x200, scoped, tag = 'scoped memory for tpu_custom_call.1']
  %s0 = inlined_call_operand.vmem [shape: f32[2,16,128], index: 0, kind: input, shape index: {}]
  %s1 = inlined_call_operand.vmem [shape: bf16[3,8,16], index: 1, kind: input, shape index: {}]
  %s2 = inlined_call_operand.vmem [shape: bf16[3,128,16], index: 2, kind: input, shape index: {}]
  %s3 = inlined_call_operand.vmem [shape: f32[1,16], index: 3, kind: input, shape index: {}]
  %s4 = inlined_call_operand.vmem [shape: bf16[3,8,8], index: 4, kind: input, shape index: {}]
  %s5 = inlined_call_operand.vmem [shape: bf16[3,16,16], index: 5, kind: input, shape index: {}]
  %s6 = inlined_call_operand.vmem [shape: f32[1,16], index: 6, kind: input, shape index: {}]
  %s7 = inlined_call_operand.vmem [shape: bf16[1,8,8], index: 7, kind: input, shape index: {}]
  %s8 = inlined_call_operand.vmem [shape: bf16[1,16,128], index: 8, kind: input, shape index: {}]
  %s9 = inlined_call_operand.vmem [shape: f32[1,128], index: 9, kind: input, shape index: {}]
  %s10 = inlined_call_operand.vmem [shape: bf16[8,16], index: 10, kind: input, shape index: {}]
  %s11 = inlined_call_operand.vmem [shape: bf16[8,16], index: 11, kind: input, shape index: {}]
  %s12 = inlined_call_operand.vmem [shape: bf16[128,64], index: 12, kind: input, shape index: {}]
  %s13 = inlined_call_operand.vmem [shape: bf16[128,64], index: 13, kind: input, shape index: {}]
  %s14 = inlined_call_operand.vmem [shape: bf16[64,128], index: 14, kind: input, shape index: {}]
  %s15 = inlined_call_operand.vmem [shape: f32[1,128], index: 15, kind: input, shape index: {}]
  %s16 = inlined_call_operand.<no memory space> [shape: f32[1,1], index: 16, kind: input, shape index: {}]
  %s17 = inlined_call_operand.hbm [shape: f32[2,8,128], index: 17, kind: output, shape index: {}]
  %s18 = sld [smem:[#allocation0]]
  $region101: #{tpu_custom_call.1} parent=0
    _
  %s20 = ssub.s32 1, %s18
  %s21 = scalar_select 0, %s20, %s18
  %22 = sst [smem:[#allocation2]] %s16
  $region1: #{tpu_custom_call.1} parent=0
    #allocation3 [shape = 'u8[8192]{0}', space=vmem, size = 0x2000, scoped, tag = 'output window, operand 0']
    #allocation4 [shape = 's32[2]{0}', space=sflag, size = 0x8, scoped, tag = 'scoped memory for tpu_custom_call.1']
    %23 = vsyncpa [#allocation4], 0
    %s24 = scalar_lea.sflag [#allocation4], 1
    %25 = vsyncpa %s24, 0
    loop: start=0, step=1, limit=4
    $region2: #{tpu_custom_call.1} parent=1 // loop_pre_header
      _
    $region3: #{tpu_custom_call.1} parent=1 // loop_header
      %s27 = sphi 0, %s31
      %p28 = scmp.ge.s32.totalorder %s27, 4
      %s37 = sphi 0, %s39
      %s40 = sphi 0, %s37
      %s41 = sphi 0, %s40
      %s57 = sphi 0, %s41
      %s61 = sphi 0, %s61
      %s63 = sphi 0, %s61
      %s64 = sphi 0, %s63
      %s78 = sphi 0, %s64
      %s82 = sphi 0, %s82
      %s84 = sphi 0, %s82
      %s85 = sphi 0, %s84
      %s99 = sphi 0, %s85
      %s103 = sphi 0, %s103
      %s105 = sphi 0, %s103
      %s106 = sphi 0, %s105
      %s120 = sphi 0, %s106
      %s124 = sphi 0, %s124
      %s126 = sphi 0, %s124
      %s127 = sphi 0, %s126
      %s141 = sphi 0, %s127
      %s145 = sphi 0, %s145
      %s147 = sphi 0, %s145
      %s148 = sphi 0, %s147
      %s162 = sphi 0, %s148
      %s166 = sphi 0, %s166
      %s168 = sphi 0, %s166
      %s169 = sphi 0, %s168
      %s183 = sphi 0, %s169
      %s187 = sphi 0, %s187
      %s189 = sphi 0, %s187
      %s190 = sphi 0, %s189
      %s204 = sphi 0, %s190
      %s208 = sphi 0, %s208
      %s210 = sphi 0, %s208
      %s211 = sphi 0, %s210
      %s225 = sphi 0, %s211
      %s229 = sphi 0, %s229
      %s231 = sphi 0, %s229
      %s232 = sphi 0, %s231
      %s246 = sphi 0, %s232
      %s250 = sphi 0, %s250
      %s252 = sphi 0, %s250
      %s253 = sphi 0, %s252
      %s267 = sphi 0, %s253
      %s271 = sphi 0, %s271
      %s273 = sphi 0, %s271
      %s274 = sphi 0, %s273
      %s288 = sphi 0, %s274
      %s292 = sphi 0, %s292
      %s294 = sphi 0, %s292
      %s295 = sphi 0, %s294
      %s309 = sphi 0, %s295
      %s313 = sphi 0, %s313
      %s315 = sphi 0, %s313
      %s316 = sphi 0, %s315
      %s330 = sphi 0, %s316
      %s334 = sphi 0, %s334
      %s336 = sphi 0, %s334
      %s337 = sphi 0, %s336
      %s351 = sphi 0, %s337
      %s355 = sphi 0, %s355
      %s357 = sphi 0, %s355
      %s358 = sphi 0, %s357
      %s372 = sphi 0, %s358
      %s376 = sphi 0, %s376
      %s378 = sphi 0, %s376
      %s379 = sphi 0, %s378
      %s393 = sphi 0, %s379
      %s399 = sphi 0, %s401
      %s402 = sphi 0, %s399
      %s403 = sphi 0, %s402
      %s419 = sphi 0, %s403
    $region4: #{tpu_custom_call.1} parent=1 // loop_header_branch
      %30 = sbr.rel (%p28) target = $region8
    $region5: #{tpu_custom_call.1} parent=1 // loop_body
      %s32 = ssub.s32 %s27, 1
      %s33 = ssub.s32 %s27, 2
      %s34 = sadd.s32 %s27, 1
      %s35 = ssub.s32 %s27, %s34
      %p36 = scmp.eq.s32.totalorder %s35, 0
      %s38 = sadd.s32 %s37, 1
      %s39 = scalar_select %p36, %s37, %s38
      %p42 = pneg %p36
      %p43 = scmp.eq.s32.totalorder %s27, 1
      %p44 = por %p42, %p43
      %p45 = scmp.ne.s32.totalorder %s37, %s40
      %p46 = scmp.eq.s32.totalorder %s27, 0
      %p47 = por %p45, %p46
      %p48 = scmp.ne.s32.totalorder %s37, %s40
      %p49 = scmp.eq.s32.totalorder %s32, 1
      %p50 = por %p48, %p49
      %p51 = scmp.ne.s32.totalorder %s40, %s41
      %p52 = scmp.eq.s32.totalorder %s32, 0
      %p53 = por %p51, %p52
      %p54 = scmp.ne.s32.totalorder %s40, %s41
      %p55 = scmp.eq.s32.totalorder %s33, 1
      %p56 = por %p54, %p55
      %p58 = scmp.ne.s32.totalorder %s41, %s57
      %p59 = scmp.eq.s32.totalorder %s33, 0
      %p60 = por %p58, %p59
      %s62 = sadd.s32 %s61, 1
      %p65 = scmp.eq.s32.totalorder %s27, 1
      %p66 = scmp.ne.s32.totalorder %s61, %s63
      %p67 = scmp.eq.s32.totalorder %s27, 0
      %p68 = por %p66, %p67
      %p69 = scmp.ne.s32.totalorder %s61, %s63
      %p70 = scmp.eq.s32.totalorder %s32, 1
      %p71 = por %p69, %p70
      %p72 = scmp.ne.s32.totalorder %s63, %s64
      %p73 = scmp.eq.s32.totalorder %s32, 0
      %p74 = por %p72, %p73
      %p75 = scmp.ne.s32.totalorder %s63, %s64
      %p76 = scmp.eq.s32.totalorder %s33, 1
      %p77 = por %p75, %p76
      %p79 = scmp.ne.s32.totalorder %s64, %s78
      %p80 = scmp.eq.s32.totalorder %s33, 0
      %p81 = por %p79, %p80
      %s83 = sadd.s32 %s82, 1
      %p86 = scmp.eq.s32.totalorder %s27, 1
      %p87 = scmp.ne.s32.totalorder %s82, %s84
      %p88 = scmp.eq.s32.totalorder %s27, 0
      %p89 = por %p87, %p88
      %p90 = scmp.ne.s32.totalorder %s82, %s84
      %p91 = scmp.eq.s32.totalorder %s32, 1
      %p92 = por %p90, %p91
      %p93 = scmp.ne.s32.totalorder %s84, %s85
      %p94 = scmp.eq.s32.totalorder %s32, 0
      %p95 = por %p93, %p94
      %p96 = scmp.ne.s32.totalorder %s84, %s85
      %p97 = scmp.eq.s32.totalorder %s33, 1
      %p98 = por %p96, %p97
      %p100 = scmp.ne.s32.totalorder %s85, %s99
      %p101 = scmp.eq.s32.totalorder %s33, 0
      %p102 = por %p100, %p101
      %s104 = sadd.s32 %s103, 1
      %p107 = scmp.eq.s32.totalorder %s27, 1
      %p108 = scmp.ne.s32.totalorder %s103, %s105
      %p109 = scmp.eq.s32.totalorder %s27, 0
      %p110 = por %p108, %p109
      %p111 = scmp.ne.s32.totalorder %s103, %s105
      %p112 = scmp.eq.s32.totalorder %s32, 1
      %p113 = por %p111, %p112
      %p114 = scmp.ne.s32.totalorder %s105, %s106
      %p115 = scmp.eq.s32.totalorder %s32, 0
      %p116 = por %p114, %p115
      %p117 = scmp.ne.s32.totalorder %s105, %s106
      %p118 = scmp.eq.s32.totalorder %s33, 1
      %p119 = por %p117, %p118
      %p121 = scmp.ne.s32.totalorder %s106, %s120
      %p122 = scmp.eq.s32.totalorder %s33, 0
      %p123 = por %p121, %p122
      %s125 = sadd.s32 %s124, 1
      %p128 = scmp.eq.s32.totalorder %s27, 1
      %p129 = scmp.ne.s32.totalorder %s124, %s126
      %p130 = scmp.eq.s32.totalorder %s27, 0
      %p131 = por %p129, %p130
      %p132 = scmp.ne.s32.totalorder %s124, %s126
      %p133 = scmp.eq.s32.totalorder %s32, 1
      %p134 = por %p132, %p133
      %p135 = scmp.ne.s32.totalorder %s126, %s127
      %p136 = scmp.eq.s32.totalorder %s32, 0
      %p137 = por %p135, %p136
      %p138 = scmp.ne.s32.totalorder %s126, %s127
      %p139 = scmp.eq.s32.totalorder %s33, 1
      %p140 = por %p138, %p139
      %p142 = scmp.ne.s32.totalorder %s127, %s141
      %p143 = scmp.eq.s32.totalorder %s33, 0
      %p144 = por %p142, %p143
      %s146 = sadd.s32 %s145, 1
      %p149 = scmp.eq.s32.totalorder %s27, 1
      %p150 = scmp.ne.s32.totalorder %s145, %s147
      %p151 = scmp.eq.s32.totalorder %s27, 0
      %p152 = por %p150, %p151
      %p153 = scmp.ne.s32.totalorder %s145, %s147
      %p154 = scmp.eq.s32.totalorder %s32, 1
      %p155 = por %p153, %p154
      %p156 = scmp.ne.s32.totalorder %s147, %s148
      %p157 = scmp.eq.s32.totalorder %s32, 0
      %p158 = por %p156, %p157
      %p159 = scmp.ne.s32.totalorder %s147, %s148
      %p160 = scmp.eq.s32.totalorder %s33, 1
      %p161 = por %p159, %p160
      %p163 = scmp.ne.s32.totalorder %s148, %s162
      %p164 = scmp.eq.s32.totalorder %s33, 0
      %p165 = por %p163, %p164
      %s167 = sadd.s32 %s166, 1
      %p170 = scmp.eq.s32.totalorder %s27, 1
      %p171 = scmp.ne.s32.totalorder %s166, %s168
      %p172 = scmp.eq.s32.totalorder %s27, 0
      %p173 = por %p171, %p172
      %p174 = scmp.ne.s32.totalorder %s166, %s168
      %p175 = scmp.eq.s32.totalorder %s32, 1
      %p176 = por %p174, %p175
      %p177 = scmp.ne.s32.totalorder %s168, %s169
      %p178 = scmp.eq.s32.totalorder %s32, 0
      %p179 = por %p177, %p178
      %p180 = scmp.ne.s32.totalorder %s168, %s169
      %p181 = scmp.eq.s32.totalorder %s33, 1
      %p182 = por %p180, %p181
      %p184 = scmp.ne.s32.totalorder %s169, %s183
      %p185 = scmp.eq.s32.totalorder %s33, 0
      %p186 = por %p184, %p185
      %s188 = sadd.s32 %s187, 1
      %p191 = scmp.eq.s32.totalorder %s27, 1
      %p192 = scmp.ne.s32.totalorder %s187, %s189
      %p193 = scmp.eq.s32.totalorder %s27, 0
      %p194 = por %p192, %p193
      %p195 = scmp.ne.s32.totalorder %s187, %s189
      %p196 = scmp.eq.s32.totalorder %s32, 1
      %p197 = por %p195, %p196
      %p198 = scmp.ne.s32.totalorder %s189, %s190
      %p199 = scmp.eq.s32.totalorder %s32, 0
      %p200 = por %p198, %p199
      %p201 = scmp.ne.s32.totalorder %s189, %s190
      %p202 = scmp.eq.s32.totalorder %s33, 1
      %p203 = por %p201, %p202
      %p205 = scmp.ne.s32.totalorder %s190, %s204
      %p206 = scmp.eq.s32.totalorder %s33, 0
      %p207 = por %p205, %p206
      %s209 = sadd.s32 %s208, 1
      %p212 = scmp.eq.s32.totalorder %s27, 1
      %p213 = scmp.ne.s32.totalorder %s208, %s210
      %p214 = scmp.eq.s32.totalorder %s27, 0
      %p215 = por %p213, %p214
      %p216 = scmp.ne.s32.totalorder %s208, %s210
      %p217 = scmp.eq.s32.totalorder %s32, 1
      %p218 = por %p216, %p217
      %p219 = scmp.ne.s32.totalorder %s210, %s211
      %p220 = scmp.eq.s32.totalorder %s32, 0
      %p221 = por %p219, %p220
      %p222 = scmp.ne.s32.totalorder %s210, %s211
      %p223 = scmp.eq.s32.totalorder %s33, 1
      %p224 = por %p222, %p223
      %p226 = scmp.ne.s32.totalorder %s211, %s225
      %p227 = scmp.eq.s32.totalorder %s33, 0
      %p228 = por %p226, %p227
      %s230 = sadd.s32 %s229, 1
      %p233 = scmp.eq.s32.totalorder %s27, 1
      %p234 = scmp.ne.s32.totalorder %s229, %s231
      %p235 = scmp.eq.s32.totalorder %s27, 0
      %p236 = por %p234, %p235
      %p237 = scmp.ne.s32.totalorder %s229, %s231
      %p238 = scmp.eq.s32.totalorder %s32, 1
      %p239 = por %p237, %p238
      %p240 = scmp.ne.s32.totalorder %s231, %s232
      %p241 = scmp.eq.s32.totalorder %s32, 0
      %p242 = por %p240, %p241
      %p243 = scmp.ne.s32.totalorder %s231, %s232
      %p244 = scmp.eq.s32.totalorder %s33, 1
      %p245 = por %p243, %p244
      %p247 = scmp.ne.s32.totalorder %s232, %s246
      %p248 = scmp.eq.s32.totalorder %s33, 0
      %p249 = por %p247, %p248
      %s251 = sadd.s32 %s250, 1
      %p254 = scmp.eq.s32.totalorder %s27, 1
      %p255 = scmp.ne.s32.totalorder %s250, %s252
      %p256 = scmp.eq.s32.totalorder %s27, 0
      %p257 = por %p255, %p256
      %p258 = scmp.ne.s32.totalorder %s250, %s252
      %p259 = scmp.eq.s32.totalorder %s32, 1
      %p260 = por %p258, %p259
      %p261 = scmp.ne.s32.totalorder %s252, %s253
      %p262 = scmp.eq.s32.totalorder %s32, 0
      %p263 = por %p261, %p262
      %p264 = scmp.ne.s32.totalorder %s252, %s253
      %p265 = scmp.eq.s32.totalorder %s33, 1
      %p266 = por %p264, %p265
      %p268 = scmp.ne.s32.totalorder %s253, %s267
      %p269 = scmp.eq.s32.totalorder %s33, 0
      %p270 = por %p268, %p269
      %s272 = sadd.s32 %s271, 1
      %p275 = scmp.eq.s32.totalorder %s27, 1
      %p276 = scmp.ne.s32.totalorder %s271, %s273
      %p277 = scmp.eq.s32.totalorder %s27, 0
      %p278 = por %p276, %p277
      %p279 = scmp.ne.s32.totalorder %s271, %s273
      %p280 = scmp.eq.s32.totalorder %s32, 1
      %p281 = por %p279, %p280
      %p282 = scmp.ne.s32.totalorder %s273, %s274
      %p283 = scmp.eq.s32.totalorder %s32, 0
      %p284 = por %p282, %p283
      %p285 = scmp.ne.s32.totalorder %s273, %s274
      %p286 = scmp.eq.s32.totalorder %s33, 1
      %p287 = por %p285, %p286
      %p289 = scmp.ne.s32.totalorder %s274, %s288
      %p290 = scmp.eq.s32.totalorder %s33, 0
      %p291 = por %p289, %p290
      %s293 = sadd.s32 %s292, 1
      %p296 = scmp.eq.s32.totalorder %s27, 1
      %p297 = scmp.ne.s32.totalorder %s292, %s294
      %p298 = scmp.eq.s32.totalorder %s27, 0
      %p299 = por %p297, %p298
      %p300 = scmp.ne.s32.totalorder %s292, %s294
      %p301 = scmp.eq.s32.totalorder %s32, 1
      %p302 = por %p300, %p301
      %p303 = scmp.ne.s32.totalorder %s294, %s295
      %p304 = scmp.eq.s32.totalorder %s32, 0
      %p305 = por %p303, %p304
      %p306 = scmp.ne.s32.totalorder %s294, %s295
      %p307 = scmp.eq.s32.totalorder %s33, 1
      %p308 = por %p306, %p307
      %p310 = scmp.ne.s32.totalorder %s295, %s309
      %p311 = scmp.eq.s32.totalorder %s33, 0
      %p312 = por %p310, %p311
      %s314 = sadd.s32 %s313, 1
      %p317 = scmp.eq.s32.totalorder %s27, 1
      %p318 = scmp.ne.s32.totalorder %s313, %s315
      %p319 = scmp.eq.s32.totalorder %s27, 0
      %p320 = por %p318, %p319
      %p321 = scmp.ne.s32.totalorder %s313, %s315
      %p322 = scmp.eq.s32.totalorder %s32, 1
      %p323 = por %p321, %p322
      %p324 = scmp.ne.s32.totalorder %s315, %s316
      %p325 = scmp.eq.s32.totalorder %s32, 0
      %p326 = por %p324, %p325
      %p327 = scmp.ne.s32.totalorder %s315, %s316
      %p328 = scmp.eq.s32.totalorder %s33, 1
      %p329 = por %p327, %p328
      %p331 = scmp.ne.s32.totalorder %s316, %s330
      %p332 = scmp.eq.s32.totalorder %s33, 0
      %p333 = por %p331, %p332
      %s335 = sadd.s32 %s334, 1
      %p338 = scmp.eq.s32.totalorder %s27, 1
      %p339 = scmp.ne.s32.totalorder %s334, %s336
      %p340 = scmp.eq.s32.totalorder %s27, 0
      %p341 = por %p339, %p340
      %p342 = scmp.ne.s32.totalorder %s334, %s336
      %p343 = scmp.eq.s32.totalorder %s32, 1
      %p344 = por %p342, %p343
      %p345 = scmp.ne.s32.totalorder %s336, %s337
      %p346 = scmp.eq.s32.totalorder %s32, 0
      %p347 = por %p345, %p346
      %p348 = scmp.ne.s32.totalorder %s336, %s337
      %p349 = scmp.eq.s32.totalorder %s33, 1
      %p350 = por %p348, %p349
      %p352 = scmp.ne.s32.totalorder %s337, %s351
      %p353 = scmp.eq.s32.totalorder %s33, 0
      %p354 = por %p352, %p353
      %s356 = sadd.s32 %s355, 1
      %p359 = scmp.eq.s32.totalorder %s27, 1
      %p360 = scmp.ne.s32.totalorder %s355, %s357
      %p361 = scmp.eq.s32.totalorder %s27, 0
      %p362 = por %p360, %p361
      %p363 = scmp.ne.s32.totalorder %s355, %s357
      %p364 = scmp.eq.s32.totalorder %s32, 1
      %p365 = por %p363, %p364
      %p366 = scmp.ne.s32.totalorder %s357, %s358
      %p367 = scmp.eq.s32.totalorder %s32, 0
      %p368 = por %p366, %p367
      %p369 = scmp.ne.s32.totalorder %s357, %s358
      %p370 = scmp.eq.s32.totalorder %s33, 1
      %p371 = por %p369, %p370
      %p373 = scmp.ne.s32.totalorder %s358, %s372
      %p374 = scmp.eq.s32.totalorder %s33, 0
      %p375 = por %p373, %p374
      %s377 = sadd.s32 %s376, 1
      %p380 = scmp.eq.s32.totalorder %s27, 1
      %p381 = scmp.ne.s32.totalorder %s376, %s378
      %p382 = scmp.eq.s32.totalorder %s27, 0
      %p383 = por %p381, %p382
      %p384 = scmp.ne.s32.totalorder %s376, %s378
      %p385 = scmp.eq.s32.totalorder %s32, 1
      %p386 = por %p384, %p385
      %p387 = scmp.ne.s32.totalorder %s378, %s379
      %p388 = scmp.eq.s32.totalorder %s32, 0
      %p389 = por %p387, %p388
      %p390 = scmp.ne.s32.totalorder %s378, %s379
      %p391 = scmp.eq.s32.totalorder %s33, 1
      %p392 = por %p390, %p391
      %p394 = scmp.ne.s32.totalorder %s379, %s393
      %p395 = scmp.eq.s32.totalorder %s33, 0
      %p396 = por %p394, %p395
      %s397 = ssub.s32 %s27, %s34
      %p398 = scmp.eq.s32.totalorder %s397, 0
      %s400 = sadd.s32 %s399, 1
      %s401 = scalar_select %p398, %s399, %s400
      %p404 = pneg %p398
      %p405 = scmp.eq.s32.totalorder %s27, 1
      %p406 = por %p404, %p405
      %p407 = scmp.ne.s32.totalorder %s399, %s402
      %p408 = scmp.eq.s32.totalorder %s27, 0
      %p409 = por %p407, %p408
      %p410 = scmp.ne.s32.totalorder %s399, %s402
      %p411 = scmp.eq.s32.totalorder %s32, 1
      %p412 = por %p410, %p411
      %p413 = scmp.ne.s32.totalorder %s402, %s403
      %p414 = scmp.eq.s32.totalorder %s32, 0
      %p415 = por %p413, %p414
      %p416 = scmp.ne.s32.totalorder %s402, %s403
      %p417 = scmp.eq.s32.totalorder %s33, 1
      %p418 = por %p416, %p417
      %p420 = scmp.ne.s32.totalorder %s403, %s419
      %p421 = scmp.eq.s32.totalorder %s33, 0
      %p422 = por %p420, %p421
      %p423 = scmp.le.s32.totalorder 1, %s27
      %p424 = scmp.lt.s32.totalorder %s27, 3
      %p425 = pnand %p423, %p424
      %p426 = pneg %p425
      // Predicated region
      $region9: #{tpu_custom_call.1} parent=5 // pred_check
        _
      $region10: #{tpu_custom_call.1} parent=5 // pred_check_branch
        %428 = sbr.rel (%p425) target = $region12
      $region11: #{tpu_custom_call.1} parent=5 // pred_region
        %s429 = ssub.s32 %s27, 1
        // Predicated region
        $region13: #{tpu_custom_call.1} parent=11 // pred_check
          %p430 = pneg %p74
        $region14: #{tpu_custom_call.1} parent=11 // pred_check_branch
          %432 = sbr.rel (%p430) target = $region16
        $region15: #{tpu_custom_call.1} parent=11 // pred_region
          _
        $region16: #{tpu_custom_call.1} parent=11 // pred_fallthru
          _
        // Predicated region
        $region17: #{tpu_custom_call.1} parent=11 // pred_check
          %p433 = pneg %p95
        $region18: #{tpu_custom_call.1} parent=11 // pred_check_branch
          %435 = sbr.rel (%p433) target = $region20
        $region19: #{tpu_custom_call.1} parent=11 // pred_region
          _
        $region20: #{tpu_custom_call.1} parent=11 // pred_fallthru
          _
        // Predicated region
        $region21: #{tpu_custom_call.1} parent=11 // pred_check
          %p436 = pneg %p116
        $region22: #{tpu_custom_call.1} parent=11 // pred_check_branch
          %438 = sbr.rel (%p436) target = $region24
        $region23: #{tpu_custom_call.1} parent=11 // pred_region
          _
        $region24: #{tpu_custom_call.1} parent=11 // pred_fallthru
          _
        // Predicated region
        $region25: #{tpu_custom_call.1} parent=11 // pred_check
          %p439 = pneg %p137
        $region26: #{tpu_custom_call.1} parent=11 // pred_check_branch
          %441 = sbr.rel (%p439) target = $region28
        $region27: #{tpu_custom_call.1} parent=11 // pred_region
          _
        $region28: #{tpu_custom_call.1} parent=11 // pred_fallthru
          _
        // Predicated region
        $region29: #{tpu_custom_call.1} parent=11 // pred_check
          %p442 = pneg %p158
        $region30: #{tpu_custom_call.1} parent=11 // pred_check_branch
          %444 = sbr.rel (%p442) target = $region32
        $region31: #{tpu_custom_call.1} parent=11 // pred_region
          _
        $region32: #{tpu_custom_call.1} parent=11 // pred_fallthru
          _
        // Predicated region
        $region33: #{tpu_custom_call.1} parent=11 // pred_check
          %p445 = pneg %p179
        $region34: #{tpu_custom_call.1} parent=11 // pred_check_branch
          %447 = sbr.rel (%p445) target = $region36
        $region35: #{tpu_custom_call.1} parent=11 // pred_region
          _
        $region36: #{tpu_custom_call.1} parent=11 // pred_fallthru
          _
        // Predicated region
        $region37: #{tpu_custom_call.1} parent=11 // pred_check
          %p448 = pneg %p200
        $region38: #{tpu_custom_call.1} parent=11 // pred_check_branch
          %450 = sbr.rel (%p448) target = $region40
        $region39: #{tpu_custom_call.1} parent=11 // pred_region
          _
        $region40: #{tpu_custom_call.1} parent=11 // pred_fallthru
          _
        // Predicated region
        $region41: #{tpu_custom_call.1} parent=11 // pred_check
          %p451 = pneg %p221
        $region42: #{tpu_custom_call.1} parent=11 // pred_check_branch
          %453 = sbr.rel (%p451) target = $region44
        $region43: #{tpu_custom_call.1} parent=11 // pred_region
          _
        $region44: #{tpu_custom_call.1} parent=11 // pred_fallthru
          _
        // Predicated region
        $region45: #{tpu_custom_call.1} parent=11 // pred_check
          %p454 = pneg %p242
        $region46: #{tpu_custom_call.1} parent=11 // pred_check_branch
          %456 = sbr.rel (%p454) target = $region48
        $region47: #{tpu_custom_call.1} parent=11 // pred_region
          _
        $region48: #{tpu_custom_call.1} parent=11 // pred_fallthru
          _
        // Predicated region
        $region49: #{tpu_custom_call.1} parent=11 // pred_check
          %p457 = pneg %p263
        $region50: #{tpu_custom_call.1} parent=11 // pred_check_branch
          %459 = sbr.rel (%p457) target = $region52
        $region51: #{tpu_custom_call.1} parent=11 // pred_region
          _
        $region52: #{tpu_custom_call.1} parent=11 // pred_fallthru
          _
        // Predicated region
        $region53: #{tpu_custom_call.1} parent=11 // pred_check
          %p460 = pneg %p284
        $region54: #{tpu_custom_call.1} parent=11 // pred_check_branch
          %462 = sbr.rel (%p460) target = $region56
        $region55: #{tpu_custom_call.1} parent=11 // pred_region
          _
        $region56: #{tpu_custom_call.1} parent=11 // pred_fallthru
          _
        // Predicated region
        $region57: #{tpu_custom_call.1} parent=11 // pred_check
          %p463 = pneg %p305
        $region58: #{tpu_custom_call.1} parent=11 // pred_check_branch
          %465 = sbr.rel (%p463) target = $region60
        $region59: #{tpu_custom_call.1} parent=11 // pred_region
          _
        $region60: #{tpu_custom_call.1} parent=11 // pred_fallthru
          _
        // Predicated region
        $region61: #{tpu_custom_call.1} parent=11 // pred_check
          %p466 = pneg %p326
        $region62: #{tpu_custom_call.1} parent=11 // pred_check_branch
          %468 = sbr.rel (%p466) target = $region64
        $region63: #{tpu_custom_call.1} parent=11 // pred_region
          _
        $region64: #{tpu_custom_call.1} parent=11 // pred_fallthru
          _
        // Predicated region
        $region65: #{tpu_custom_call.1} parent=11 // pred_check
          %p469 = pneg %p347
        $region66: #{tpu_custom_call.1} parent=11 // pred_check_branch
          %471 = sbr.rel (%p469) target = $region68
        $region67: #{tpu_custom_call.1} parent=11 // pred_region
          _
        $region68: #{tpu_custom_call.1} parent=11 // pred_fallthru
          _
        // Predicated region
        $region69: #{tpu_custom_call.1} parent=11 // pred_check
          %p472 = pneg %p368
        $region70: #{tpu_custom_call.1} parent=11 // pred_check_branch
          %474 = sbr.rel (%p472) target = $region72
        $region71: #{tpu_custom_call.1} parent=11 // pred_region
          _
        $region72: #{tpu_custom_call.1} parent=11 // pred_fallthru
          _
        // Predicated region
        $region73: #{tpu_custom_call.1} parent=11 // pred_check
          %p475 = pneg %p389
        $region74: #{tpu_custom_call.1} parent=11 // pred_check_branch
          %477 = sbr.rel (%p475) target = $region76
        $region75: #{tpu_custom_call.1} parent=11 // pred_region
          _
        $region76: #{tpu_custom_call.1} parent=11 // pred_fallthru
          _
      $region12: #{tpu_custom_call.1} parent=5 // pred_fallthru
        _
      %p478 = scmp.lt.s32.totalorder %s27, 2
      // Predicated region
      $region77: #{tpu_custom_call.1} parent=5 // pred_check
        %p479 = pneg %p478
      $region78: #{tpu_custom_call.1} parent=5 // pred_check_branch
        %481 = sbr.rel (%p479) target = $region80
      $region79: #{tpu_custom_call.1} parent=5 // pred_region
        // Predicated region
        $region81: #{tpu_custom_call.1} parent=79 // pred_check
          %p482 = pneg %p47
        $region82: #{tpu_custom_call.1} parent=79 // pred_check_branch
          %484 = sbr.rel (%p482) target = $region84
        $region83: #{tpu_custom_call.1} parent=79 // pred_region
          %p485 = scmp.lt.s32.totalorder %s27, 1
          %s486 = scalar_select %p485, %s27, 1
          %s487 = smul.addr %s486, 2
          %s488 = smul.addr %s487, 8
          %s489 = scalar_lea.vmem %s0, %s488
        $region84: #{tpu_custom_call.1} parent=79 // pred_fallthru
          _
      $region80: #{tpu_custom_call.1} parent=5 // pred_fallthru
        _
      %p490 = scmp.le.s32.totalorder 1, %s27
      %p491 = scmp.lt.s32.totalorder %s27, 3
      %p492 = pnand %p490, %p491
      %p493 = pneg %p492
      // Predicated region
      $region85: #{tpu_custom_call.1} parent=5 // pred_check
        _
      $region86: #{tpu_custom_call.1} parent=5 // pred_check_branch
        %495 = sbr.rel (%p492) target = $region88
      $region87: #{tpu_custom_call.1} parent=5 // pred_region
        %s496 = ssub.s32 %s27, 1
        %p497 = scmp.lt.s32.totalorder %s32, 1
        %s498 = scalar_select %p497, %s32, 1
        %s499 = smul.addr %s498, 2
        %s500 = smul.addr %s499, 8
        %s501 = scalar_lea.vmem %s0, %s500
        %p502 = pneg %p53
        %p503 = pneg %p50
        %p504 = pneg %p74
        %p505 = pneg %p71
        %p506 = pneg %p95
        %p507 = pneg %p92
        %p508 = pneg %p116
        %p509 = pneg %p113
        %p510 = pneg %p137
        %p511 = pneg %p134
        %p512 = pneg %p158
        %p513 = pneg %p155
        %p514 = pneg %p179
        %p515 = pneg %p176
        %p516 = pneg %p200
        %p517 = pneg %p197
        %p518 = pneg %p221
        %p519 = pneg %p218
        %p520 = pneg %p242
        %p521 = pneg %p239
        %p522 = pneg %p263
        %p523 = pneg %p260
        %p524 = pneg %p284
        %p525 = pneg %p281
        %p526 = pneg %p305
        %p527 = pneg %p302
        %p528 = pneg %p326
        %p529 = pneg %p323
        %p530 = pneg %p347
        %p531 = pneg %p344
        %p532 = pneg %p368
        %p533 = pneg %p365
        %p534 = pneg %p389
        %p535 = pneg %p386
        %p536 = pneg %p415
        %p537 = pneg %p412
        %s538 = sand.u32 %s402, 1
        %s539 = scalar_lea.sflag [#allocation4], %s538
        %s540 = sand.u32 %s402, 1
        %s541 = smul.addr %s540, 8
        %s542 = scalar_lea.vmem [#allocation3], %s541
        %p543 = scmp.lt.s32.totalorder %s32, 1
        %s544 = scalar_select %p543, %s32, 1
        %s545 = smul.addr %s544, 2
        %s546 = smul.addr %s545, 8
        %s547 = scalar_lea.vmem %s0, %s546
        %v549 = vld [vmem:[%s547] sm:$0xff]
        %v550 = vld [vmem:[%s547 + $0x8] sm:$0xff]
        %v551 = vpack.c.bf16 %v550, %v549
        %v552 = vld [vmem:[%s1] sm:$0xf]
        %vm553 = vcmask 130048
        %v555 = vsel %vm553, %v552, 0
        %557 = vmatprep.subr.bf16.mxu0 0
        %558 = vmatpush1.bf16.msra.mxu0 %v551
        %559 = vmatprep.subr.bf16.mxu0 0
        %560 = vmatpush1.bf16.msra.mxu0 0
        %561 = vmatprep.subr.bf16.mxu0 0
        %562 = vmatpush1.bf16.msra.mxu0 0
        %563 = vmatprep.subr.bf16.mxu0 0
        %564 = vmatpush1.bf16.msra.mxu0 0
        %565 = vmatprep.subr.bf16.mxu0 0
        %566 = vmatpush1.bf16.msra.mxu0 0
        %567 = vmatprep.subr.bf16.mxu0 0
        %568 = vmatpush1.bf16.msra.mxu0 0
        %569 = vmatprep.subr.bf16.mxu0 0
        %570 = vmatpush1.bf16.msra.mxu0 0
        %571 = vmatprep.subr.bf16.mxu0 0
        %572 = vmatpush1.bf16.msra.mxu0 0
        %573 = vmatprep.subr.bf16.mxu0 0
        %574 = vmatpush1.bf16.msra.mxu0 0
        %575 = vmatprep.subr.bf16.mxu0 0
        %576 = vmatpush1.bf16.msra.mxu0 0
        %577 = vmatprep.subr.bf16.mxu0 0
        %578 = vmatpush1.bf16.msra.mxu0 0
        %579 = vmatprep.subr.bf16.mxu0 0
        %580 = vmatpush1.bf16.msra.mxu0 0
        %581 = vmatprep.subr.bf16.mxu0 0
        %582 = vmatpush1.bf16.msra.mxu0 0
        %583 = vmatprep.subr.bf16.mxu0 0
        %584 = vmatpush1.bf16.msra.mxu0 0
        %585 = vmatprep.subr.bf16.mxu0 0
        %586 = vmatpush1.bf16.msra.mxu0 0
        %587 = vmatprep.subr.bf16.mxu0 0
        %588 = vmatpush1.bf16.msra.mxu0 0
        %589 = vmatprep.mubr.bf16.mxu0 0
        %590 = vmatmul.mubr.bf16.gmra.mrb[0].mxu0 %v555
        %v591 = vpop.f32.mrb[0].mxu0
        %v592 = vadd.f32 0.0, %v591
        %v593 = vpop.f32.mrb[0].mxu0
        %v594 = vpop.f32.mrb[0].mxu0
        %v595 = vpop.f32.mrb[0].mxu0
        %596 = vdwg.mxu0
        %v597 = vpack.c.bf16 %v592, %v592
        %v598 = vld [vmem:[%s2] sm:$0xf]
        %v599 = vld [vmem:[%s2 + $0x4] sm:$0xf]
        %v600 = vld [vmem:[%s2 + $0x8] sm:$0xf]
        %v601 = vld [vmem:[%s2 + $0xc] sm:$0xf]
        %v602 = vld [vmem:[%s2 + $0x10] sm:$0xf]
        %v603 = vld [vmem:[%s2 + $0x14] sm:$0xf]
        %v604 = vld [vmem:[%s2 + $0x18] sm:$0xf]
        %v605 = vld [vmem:[%s2 + $0x1c] sm:$0xf]
        %v606 = vld [vmem:[%s2 + $0x20] sm:$0xf]
        %v607 = vld [vmem:[%s2 + $0x24] sm:$0xf]
        %v608 = vld [vmem:[%s2 + $0x28] sm:$0xf]
        %v609 = vld [vmem:[%s2 + $0x2c] sm:$0xf]
        %v610 = vld [vmem:[%s2 + $0x30] sm:$0xf]
        %v611 = vld [vmem:[%s2 + $0x34] sm:$0xf]
        %v612 = vld [vmem:[%s2 + $0x38] sm:$0xf]
        %v613 = vld [vmem:[%s2 + $0x3c] sm:$0xf]
        %s614 = scalar_lea.vmem %s1, 4
        %v615 = vld [vmem:[%s614] sm:$0xf]
        %v617 = vsel %vm553, %v615, 0
        %619 = vmatprep.subr.bf16.mxu0 0
        %620 = vmatpush1.bf16.msra.mxu0 %v551
        %621 = vmatprep.subr.bf16.mxu0 0
        %622 = vmatpush1.bf16.msra.mxu0 0
        %623 = vmatprep.subr.bf16.mxu0 0
        %624 = vmatpush1.bf16.msra.mxu0 0
        %625 = vmatprep.subr.bf16.mxu0 0
        %626 = vmatpush1.bf16.msra.mxu0 0
        %627 = vmatprep.subr.bf16.mxu0 0
        %628 = vmatpush1.bf16.msra.mxu0 0
        %629 = vmatprep.subr.bf16.mxu0 0
        %630 = vmatpush1.bf16.msra.mxu0 0
        %631 = vmatprep.subr.bf16.mxu0 0
        %632 = vmatpush1.bf16.msra.mxu0 0
        %633 = vmatprep.subr.bf16.mxu0 0
        %634 = vmatpush1.bf16.msra.mxu0 0
        %635 = vmatprep.subr.bf16.mxu0 0
        %636 = vmatpush1.bf16.msra.mxu0 0
        %637 = vmatprep.subr.bf16.mxu0 0
        %638 = vmatpush1.bf16.msra.mxu0 0
        %639 = vmatprep.subr.bf16.mxu0 0
        %640 = vmatpush1.bf16.msra.mxu0 0
        %641 = vmatprep.subr.bf16.mxu0 0
        %642 = vmatpush1.bf16.msra.mxu0 0
        %643 = vmatprep.subr.bf16.mxu0 0
        %644 = vmatpush1.bf16.msra.mxu0 0
        %645 = vmatprep.subr.bf16.mxu0 0
        %646 = vmatpush1.bf16.msra.mxu0 0
        %647 = vmatprep.subr.bf16.mxu0 0
        %648 = vmatpush1.bf16.msra.mxu0 0
        %649 = vmatprep.subr.bf16.mxu0 0
        %650 = vmatpush1.bf16.msra.mxu0 0
        %651 = vmatprep.mubr.bf16.mxu0 0
        %652 = vmatmul.mubr.bf16.gmra.mrb[0].mxu0 %v617
        %v653 = vpop.f32.mrb[0].mxu0
        %v654 = vadd.f32 0.0, %v653
        %v655 = vpop.f32.mrb[0].mxu0
        %v656 = vpop.f32.mrb[0].mxu0
        %v657 = vpop.f32.mrb[0].mxu0
        %658 = vdwg.mxu0
        %v659 = vpack.c.bf16 %v654, %v654
        %s660 = scalar_lea.vmem %s2, 64
        %v661 = vld [vmem:[%s660] sm:$0xf]
        %v662 = vld [vmem:[%s660 + $0x4] sm:$0xf]
        %v663 = vld [vmem:[%s660 + $0x8] sm:$0xf]
        %v664 = vld [vmem:[%s660 + $0xc] sm:$0xf]
        %v665 = vld [vmem:[%s660 + $0x10] sm:$0xf]
        %v666 = vld [vmem:[%s660 + $0x14] sm:$0xf]
        %v667 = vld [vmem:[%s660 + $0x18] sm:$0xf]
        %v668 = vld [vmem:[%s660 + $0x1c] sm:$0xf]
        %v669 = vld [vmem:[%s660 + $0x20] sm:$0xf]
        %v670 = vld [vmem:[%s660 + $0x24] sm:$0xf]
        %v671 = vld [vmem:[%s660 + $0x28] sm:$0xf]
        %v672 = vld [vmem:[%s660 + $0x2c] sm:$0xf]
        %v673 = vld [vmem:[%s660 + $0x30] sm:$0xf]
        %v674 = vld [vmem:[%s660 + $0x34] sm:$0xf]
        %v675 = vld [vmem:[%s660 + $0x38] sm:$0xf]
        %v676 = vld [vmem:[%s660 + $0x3c] sm:$0xf]
        %v693 = vunpack.c.l.b16 %v661
        %v694 = vunpack.c.l.b16 %v662
        %v695 = vunpack.c.l.b16 %v663
        %v696 = vunpack.c.l.b16 %v664
        %v697 = vunpack.c.l.b16 %v665
        %v698 = vunpack.c.l.b16 %v666
        %v699 = vunpack.c.l.b16 %v667
        %v700 = vunpack.c.l.b16 %v668
        %v701 = vunpack.c.l.b16 %v669
        %v702 = vunpack.c.l.b16 %v670
        %v703 = vunpack.c.l.b16 %v671
        %v704 = vunpack.c.l.b16 %v672
        %v705 = vunpack.c.l.b16 %v673
        %v706 = vunpack.c.l.b16 %v674
        %v707 = vunpack.c.l.b16 %v675
        %v708 = vunpack.c.l.b16 %v676
        %v709 = vpack.c.b16 %v694, %v693
        %v710 = vpack.c.b16 %v696, %v695
        %v711 = vpack.c.b16 %v698, %v697
        %v712 = vpack.c.b16 %v700, %v699
        %v713 = vpack.c.b16 %v702, %v701
        %v714 = vpack.c.b16 %v704, %v703
        %v715 = vpack.c.b16 %v706, %v705
        %v716 = vpack.c.b16 %v708, %v707
        %725 = vmatprep.subr.bf16.mxu0 0
        %726 = vmatpush1.bf16.msra.mxu0 %v709
        %727 = vmatprep.subr.bf16.mxu0 0
        %728 = vmatpush1.bf16.msra.mxu0 %v710
        %729 = vmatprep.subr.bf16.mxu0 0
        %730 = vmatpush1.bf16.msra.mxu0 %v711
        %731 = vmatprep.subr.bf16.mxu0 0
        %732 = vmatpush1.bf16.msra.mxu0 %v712
        %733 = vmatprep.subr.bf16.mxu0 0
        %734 = vmatpush1.bf16.msra.mxu0 %v713
        %735 = vmatprep.subr.bf16.mxu0 0
        %736 = vmatpush1.bf16.msra.mxu0 %v714
        %737 = vmatprep.subr.bf16.mxu0 0
        %738 = vmatpush1.bf16.msra.mxu0 %v715
        %739 = vmatprep.subr.bf16.mxu0 0
        %740 = vmatpush1.bf16.msra.mxu0 %v716
        %741 = vmatprep.subr.bf16.mxu0 0
        %742 = vmatpush1.bf16.msra.mxu0 0
        %743 = vmatprep.subr.bf16.mxu0 0
        %744 = vmatpush1.bf16.msra.mxu0 0
        %745 = vmatprep.subr.bf16.mxu0 0
        %746 = vmatpush1.bf16.msra.mxu0 0
        %747 = vmatprep.subr.bf16.mxu0 0
        %748 = vmatpush1.bf16.msra.mxu0 0
        %749 = vmatprep.subr.bf16.mxu0 0
        %750 = vmatpush1.bf16.msra.mxu0 0
        %751 = vmatprep.subr.bf16.mxu0 0
        %752 = vmatpush1.bf16.msra.mxu0 0
        %753 = vmatprep.subr.bf16.mxu0 0
        %754 = vmatpush1.bf16.msra.mxu0 0
        %755 = vmatprep.subr.bf16.mxu0 0
        %756 = vmatpush1.bf16.msra.mxu0 0
        %757 = vmatprep.mubr.bf16.mxu0 0
        %758 = vmatmul.mubr.bf16.gmra.mrb[0].mxu0 %v659
        %v759 = vpop.f32.mrb[0].mxu0
        %v760 = vadd.f32 0.0, %v759
        %v761 = vpop.f32.mrb[0].mxu0
        %v762 = vpop.f32.mrb[0].mxu0
        %v763 = vpop.f32.mrb[0].mxu0
        %764 = vdwg.mxu0
        %v781 = vunpack.c.l.b16 %v598
        %v782 = vunpack.c.l.b16 %v599
        %v783 = vunpack.c.l.b16 %v600
        %v784 = vunpack.c.l.b16 %v601
        %v785 = vunpack.c.l.b16 %v602
        %v786 = vunpack.c.l.b16 %v603
        %v787 = vunpack.c.l.b16 %v604
        %v788 = vunpack.c.l.b16 %v605
        %v789 = vunpack.c.l.b16 %v606
        %v790 = vunpack.c.l.b16 %v607
        %v791 = vunpack.c.l.b16 %v608
        %v792 = vunpack.c.l.b16 %v609
        %v793 = vunpack.c.l.b16 %v610
        %v794 = vunpack.c.l.b16 %v611
        %v795 = vunpack.c.l.b16 %v612
        %v796 = vunpack.c.l.b16 %v613
        %v797 = vpack.c.b16 %v782, %v781
        %v798 = vpack.c.b16 %v784, %v783
        %v799 = vpack.c.b16 %v786, %v785
        %v800 = vpack.c.b16 %v788, %v787
        %v801 = vpack.c.b16 %v790, %v789
        %v802 = vpack.c.b16 %v792, %v791
        %v803 = vpack.c.b16 %v794, %v793
        %v804 = vpack.c.b16 %v796, %v795
        %813 = vmatprep.subr.bf16.mxu0 0
        %814 = vmatpush1.bf16.msra.mxu0 %v797
        %815 = vmatprep.subr.bf16.mxu0 0
        %816 = vmatpush1.bf16.msra.mxu0 %v798
        %817 = vmatprep.subr.bf16.mxu0 0
        %818 = vmatpush1.bf16.msra.mxu0 %v799
        %819 = vmatprep.subr.bf16.mxu0 0
        %820 = vmatpush1.bf16.msra.mxu0 %v800
        %821 = vmatprep.subr.bf16.mxu0 0
        %822 = vmatpush1.bf16.msra.mxu0 %v801
        %823 = vmatprep.subr.bf16.mxu0 0
        %824 = vmatpush1.bf16.msra.mxu0 %v802
        %825 = vmatprep.subr.bf16.mxu0 0
        %826 = vmatpush1.bf16.msra.mxu0 %v803
        %827 = vmatprep.subr.bf16.mxu0 0
        %828 = vmatpush1.bf16.msra.mxu0 %v804
        %829 = vmatprep.subr.bf16.mxu0 0
        %830 = vmatpush1.bf16.msra.mxu0 0
        %831 = vmatprep.subr.bf16.mxu0 0
        %832 = vmatpush1.bf16.msra.mxu0 0
        %833 = vmatprep.subr.bf16.mxu0 0
        %834 = vmatpush1.bf16.msra.mxu0 0
        %835 = vmatprep.subr.bf16.mxu0 0
        %836 = vmatpush1.bf16.msra.mxu0 0
        %837 = vmatprep.subr.bf16.mxu0 0
        %838 = vmatpush1.bf16.msra.mxu0 0
        %839 = vmatprep.subr.bf16.mxu0 0
        %840 = vmatpush1.bf16.msra.mxu0 0
        %841 = vmatprep.subr.bf16.mxu0 0
        %842 = vmatpush1.bf16.msra.mxu0 0
        %843 = vmatprep.subr.bf16.mxu0 0
        %844 = vmatpush1.bf16.msra.mxu0 0
        %845 = vmatprep.mubr.bf16.mxu0 0
        %846 = vmatmul.mubr.bf16.gmra.mrb[0].mxu0 %v597
        %v847 = vpop.f32.mrb[0].mxu0
        %v848 = vadd.f32 %v760, %v847
        %v849 = vpop.f32.mrb[0].mxu0
        %v850 = vpop.f32.mrb[0].mxu0
        %v851 = vpop.f32.mrb[0].mxu0
        %852 = vdwg.mxu0
        %s853 = scalar_lea.vmem %s1, 8
        %v854 = vld [vmem:[%s853] sm:$0xf]
        %v856 = vsel %vm553, %v854, 0
        %858 = vmatprep.subr.bf16.mxu0 0
        %859 = vmatpush1.bf16.msra.mxu0 %v551
        %860 = vmatprep.subr.bf16.mxu0 0
        %861 = vmatpush1.bf16.msra.mxu0 0
        %862 = vmatprep.subr.bf16.mxu0 0
        %863 = vmatpush1.bf16.msra.mxu0 0
        %864 = vmatprep.subr.bf16.mxu0 0
        %865 = vmatpush1.bf16.msra.mxu0 0
        %866 = vmatprep.subr.bf16.mxu0 0
        %867 = vmatpush1.bf16.msra.mxu0 0
        %868 = vmatprep.subr.bf16.mxu0 0
        %869 = vmatpush1.bf16.msra.mxu0 0
        %870 = vmatprep.subr.bf16.mxu0 0
        %871 = vmatpush1.bf16.msra.mxu0 0
        %872 = vmatprep.subr.bf16.mxu0 0
        %873 = vmatpush1.bf16.msra.mxu0 0
        %874 = vmatprep.subr.bf16.mxu0 0
        %875 = vmatpush1.bf16.msra.mxu0 0
        %876 = vmatprep.subr.bf16.mxu0 0
        %877 = vmatpush1.bf16.msra.mxu0 0
        %878 = vmatprep.subr.bf16.mxu0 0
        %879 = vmatpush1.bf16.msra.mxu0 0
        %880 = vmatprep.subr.bf16.mxu0 0
        %881 = vmatpush1.bf16.msra.mxu0 0
        %882 = vmatprep.subr.bf16.mxu0 0
        %883 = vmatpush1.bf16.msra.mxu0 0
        %884 = vmatprep.subr.bf16.mxu0 0
        %885 = vmatpush1.bf16.msra.mxu0 0
        %886 = vmatprep.subr.bf16.mxu0 0
        %887 = vmatpush1.bf16.msra.mxu0 0
        %888 = vmatprep.subr.bf16.mxu0 0
        %889 = vmatpush1.bf16.msra.mxu0 0
        %890 = vmatprep.mubr.bf16.mxu0 0
        %891 = vmatmul.mubr.bf16.gmra.mrb[0].mxu0 %v856
        %v892 = vpop.f32.mrb[0].mxu0
        %v893 = vadd.f32 0.0, %v892
        %v894 = vpop.f32.mrb[0].mxu0
        %v895 = vpop.f32.mrb[0].mxu0
        %v896 = vpop.f32.mrb[0].mxu0
        %897 = vdwg.mxu0
        %v898 = vpack.c.bf16 %v893, %v893
        %s899 = scalar_lea.vmem %s2, 128
        %v900 = vld [vmem:[%s899] sm:$0xf]
        %v901 = vld [vmem:[%s899 + $0x4] sm:$0xf]
        %v902 = vld [vmem:[%s899 + $0x8] sm:$0xf]
        %v903 = vld [vmem:[%s899 + $0xc] sm:$0xf]
        %v904 = vld [vmem:[%s899 + $0x10] sm:$0xf]
        %v905 = vld [vmem:[%s899 + $0x14] sm:$0xf]
        %v906 = vld [vmem:[%s899 + $0x18] sm:$0xf]
        %v907 = vld [vmem:[%s899 + $0x1c] sm:$0xf]
        %v908 = vld [vmem:[%s899 + $0x20] sm:$0xf]
        %v909 = vld [vmem:[%s899 + $0x24] sm:$0xf]
        %v910 = vld [vmem:[%s899 + $0x28] sm:$0xf]
        %v911 = vld [vmem:[%s899 + $0x2c] sm:$0xf]
        %v912 = vld [vmem:[%s899 + $0x30] sm:$0xf]
        %v913 = vld [vmem:[%s899 + $0x34] sm:$0xf]
        %v914 = vld [vmem:[%s899 + $0x38] sm:$0xf]
        %v915 = vld [vmem:[%s899 + $0x3c] sm:$0xf]
        %v932 = vunpack.c.l.b16 %v900
        %v933 = vunpack.c.l.b16 %v901
        %v934 = vunpack.c.l.b16 %v902
        %v935 = vunpack.c.l.b16 %v903
        %v936 = vunpack.c.l.b16 %v904
        %v937 = vunpack.c.l.b16 %v905
        %v938 = vunpack.c.l.b16 %v906
        %v939 = vunpack.c.l.b16 %v907
        %v940 = vunpack.c.l.b16 %v908
        %v941 = vunpack.c.l.b16 %v909
        %v942 = vunpack.c.l.b16 %v910
        %v943 = vunpack.c.l.b16 %v911
        %v944 = vunpack.c.l.b16 %v912
        %v945 = vunpack.c.l.b16 %v913
        %v946 = vunpack.c.l.b16 %v914
        %v947 = vunpack.c.l.b16 %v915
        %v948 = vpack.c.b16 %v933, %v932
        %v949 = vpack.c.b16 %v935, %v934
        %v950 = vpack.c.b16 %v937, %v936
        %v951 = vpack.c.b16 %v939, %v938
        %v952 = vpack.c.b16 %v941, %v940
        %v953 = vpack.c.b16 %v943, %v942
        %v954 = vpack.c.b16 %v945, %v944
        %v955 = vpack.c.b16 %v947, %v946
        %964 = vmatprep.subr.bf16.mxu0 0
        %965 = vmatpush1.bf16.msra.mxu0 %v948
        %966 = vmatprep.subr.bf16.mxu0 0
        %967 = vmatpush1.bf16.msra.mxu0 %v949
        %968 = vmatprep.subr.bf16.mxu0 0
        %969 = vmatpush1.bf16.msra.mxu0 %v950
        %970 = vmatprep.subr.bf16.mxu0 0
        %971 = vmatpush1.bf16.msra.mxu0 %v951
        %972 = vmatprep.subr.bf16.mxu0 0
        %973 = vmatpush1.bf16.msra.mxu0 %v952
        %974 = vmatprep.subr.bf16.mxu0 0
        %975 = vmatpush1.bf16.msra.mxu0 %v953
        %976 = vmatprep.subr.bf16.mxu0 0
        %977 = vmatpush1.bf16.msra.mxu0 %v954
        %978 = vmatprep.subr.bf16.mxu0 0
        %979 = vmatpush1.bf16.msra.mxu0 %v955
        %980 = vmatprep.subr.bf16.mxu0 0
        %981 = vmatpush1.bf16.msra.mxu0 0
        %982 = vmatprep.subr.bf16.mxu0 0
        %983 = vmatpush1.bf16.msra.mxu0 0
        %984 = vmatprep.subr.bf16.mxu0 0
        %985 = vmatpush1.bf16.msra.mxu0 0
        %986 = vmatprep.subr.bf16.mxu0 0
        %987 = vmatpush1.bf16.msra.mxu0 0
        %988 = vmatprep.subr.bf16.mxu0 0
        %989 = vmatpush1.bf16.msra.mxu0 0
        %990 = vmatprep.subr.bf16.mxu0 0
        %991 = vmatpush1.bf16.msra.mxu0 0
        %992 = vmatprep.subr.bf16.mxu0 0
        %993 = vmatpush1.bf16.msra.mxu0 0
        %994 = vmatprep.subr.bf16.mxu0 0
        %995 = vmatpush1.bf16.msra.mxu0 0
        %996 = vmatprep.mubr.bf16.mxu0 0
        %997 = vmatmul.mubr.bf16.gmra.mrb[0].mxu0 %v898
        %v998 = vpop.f32.mrb[0].mxu0
        %v999 = vadd.f32 0.0, %v998
        %v1000 = vpop.f32.mrb[0].mxu0
        %v1001 = vpop.f32.mrb[0].mxu0
        %v1002 = vpop.f32.mrb[0].mxu0
        %1003 = vdwg.mxu0
        %v1004 = vadd.f32 %v848, %v999
        %v1005 = vld [vmem:[%s3] sm:$0x1]
        %v1007 = vlaneseq
        %v1008 = vshrl.u32 %v1007, 7
        %v1009 = vsub.s32 0, %v1008
        %v1010 = vrot.slane %v1005, %v1009
        %v1012 = vadd.f32 %v1004, %v1010
        %v1013 = vmax.f32 %v1012, 0.0
        %v1014 = vpack.c.bf16 %v1013, %v1013
        %v1015 = vld [vmem:[%s4] sm:$0xf]
        %vm1016 = vcmask 64512
        %v1018 = vsel %vm1016, %v1015, 0
        %vm1020 = vcmask 1043456
        %v1022 = vsel %vm1020, %v1014, 0
        %1024 = vmatprep.subr.bf16.mxu0 0
        %1025 = vmatpush1.bf16.msra.mxu0 %v1022
        %1026 = vmatprep.subr.bf16.mxu0 0
        %1027 = vmatpush1.bf16.msra.mxu0 0
        %1028 = vmatprep.subr.bf16.mxu0 0
        %1029 = vmatpush1.bf16.msra.mxu0 0
        %1030 = vmatprep.subr.bf16.mxu0 0
        %1031 = vmatpush1.bf16.msra.mxu0 0
        %1032 = vmatprep.subr.bf16.mxu0 0
        %1033 = vmatpush1.bf16.msra.mxu0 0
        %1034 = vmatprep.subr.bf16.mxu0 0
        %1035 = vmatpush1.bf16.msra.mxu0 0
        %1036 = vmatprep.subr.bf16.mxu0 0
        %1037 = vmatpush1.bf16.msra.mxu0 0
        %1038 = vmatprep.subr.bf16.mxu0 0
        %1039 = vmatpush1.bf16.msra.mxu0 0
        %1040 = vmatprep.subr.bf16.mxu0 0
        %1041 = vmatpush1.bf16.msra.mxu0 0
        %1042 = vmatprep.subr.bf16.mxu0 0
        %1043 = vmatpush1.bf16.msra.mxu0 0
        %1044 = vmatprep.subr.bf16.mxu0 0
        %1045 = vmatpush1.bf16.msra.mxu0 0
        %1046 = vmatprep.subr.bf16.mxu0 0
        %1047 = vmatpush1.bf16.msra.mxu0 0
        %1048 = vmatprep.subr.bf16.mxu0 0
        %1049 = vmatpush1.bf16.msra.mxu0 0
        %1050 = vmatprep.subr.bf16.mxu0 0
        %1051 = vmatpush1.bf16.msra.mxu0 0
        %1052 = vmatprep.subr.bf16.mxu0 0
        %1053 = vmatpush1.bf16.msra.mxu0 0
        %1054 = vmatprep.subr.bf16.mxu0 0
        %1055 = vmatpush1.bf16.msra.mxu0 0
        %1056 = vmatprep.mubr.bf16.mxu0 0
        %1057 = vmatmul.mubr.bf16.gmra.mrb[0].mxu0 %v1018
        %v1058 = vpop.f32.mrb[0].mxu0
        %v1059 = vadd.f32 0.0, %v1058
        %v1060 = vpop.f32.mrb[0].mxu0
        %v1061 = vpop.f32.mrb[0].mxu0
        %v1062 = vpop.f32.mrb[0].mxu0
        %1063 = vdwg.mxu0
        %v1064 = vpack.c.bf16 %v1059, %v1059
        %v1065 = vld [vmem:[%s5] sm:$0xf]
        %v1066 = vld [vmem:[%s5 + $0x4] sm:$0xf]
        %s1067 = scalar_lea.vmem %s5, 8
        %v1068 = vld [vmem:[%s1067] sm:$0xf]
        %v1069 = vld [vmem:[%s1067 + $0x4] sm:$0xf]
        %v1072 = vunpack.c.l.b16 %v1068
        %v1073 = vunpack.c.l.b16 %v1069
        %v1074 = vpack.c.b16 %v1073, %v1072
        %v1076 = vsel %vm553, %v1014, 0
        %1078 = vmatprep.subr.bf16.mxu0 0
        %1079 = vmatpush1.bf16.msra.mxu0 %v1074
        %1080 = vmatprep.subr.bf16.mxu0 0
        %1081 = vmatpush1.bf16.msra.mxu0 0
        %1082 = vmatprep.subr.bf16.mxu0 0
        %1083 = vmatpush1.bf16.msra.mxu0 0
        %1084 = vmatprep.subr.bf16.mxu0 0
        %1085 = vmatpush1.bf16.msra.mxu0 0
        %1086 = vmatprep.subr.bf16.mxu0 0
        %1087 = vmatpush1.bf16.msra.mxu0 0
        %1088 = vmatprep.subr.bf16.mxu0 0
        %1089 = vmatpush1.bf16.msra.mxu0 0
        %1090 = vmatprep.subr.bf16.mxu0 0
        %1091 = vmatpush1.bf16.msra.mxu0 0
        %1092 = vmatprep.subr.bf16.mxu0 0
        %1093 = vmatpush1.bf16.msra.mxu0 0
        %1094 = vmatprep.subr.bf16.mxu0 0
        %1095 = vmatpush1.bf16.msra.mxu0 0
        %1096 = vmatprep.subr.bf16.mxu0 0
        %1097 = vmatpush1.bf16.msra.mxu0 0
        %1098 = vmatprep.subr.bf16.mxu0 0
        %1099 = vmatpush1.bf16.msra.mxu0 0
        %1100 = vmatprep.subr.bf16.mxu0 0
        %1101 = vmatpush1.bf16.msra.mxu0 0
        %1102 = vmatprep.subr.bf16.mxu0 0
        %1103 = vmatpush1.bf16.msra.mxu0 0
        %1104 = vmatprep.subr.bf16.mxu0 0
        %1105 = vmatpush1.bf16.msra.mxu0 0
        %1106 = vmatprep.subr.bf16.mxu0 0
        %1107 = vmatpush1.bf16.msra.mxu0 0
        %1108 = vmatprep.subr.bf16.mxu0 0
        %1109 = vmatpush1.bf16.msra.mxu0 0
        %1110 = vmatprep.mubr.bf16.mxu0 0
        %1111 = vmatmul.mubr.bf16.gmra.mrb[0].mxu0 %v1076
        %v1112 = vpop.f32.mrb[0].mxu0
        %v1113 = vadd.f32 0.0, %v1112
        %v1114 = vpop.f32.mrb[0].mxu0
        %v1115 = vpop.f32.mrb[0].mxu0
        %v1116 = vpop.f32.mrb[0].mxu0
        %1117 = vdwg.mxu0
        %v1120 = vunpack.c.l.b16 %v1065
        %v1121 = vunpack.c.l.b16 %v1066
        %v1122 = vpack.c.b16 %v1121, %v1120
        %v1125 = vsel %vm553, %v1064, 0
        %1127 = vmatprep.subr.bf16.mxu0 0
        %1128 = vmatpush1.bf16.msra.mxu0 %v1122
        %1129 = vmatprep.subr.bf16.mxu0 0
        %1130 = vmatpush1.bf16.msra.mxu0 0
        %1131 = vmatprep.subr.bf16.mxu0 0
        %1132 = vmatpush1.bf16.msra.mxu0 0
        %1133 = vmatprep.subr.bf16.mxu0 0
        %1134 = vmatpush1.bf16.msra.mxu0 0
        %1135 = vmatprep.subr.bf16.mxu0 0
        %1136 = vmatpush1.bf16.msra.mxu0 0
        %1137 = vmatprep.subr.bf16.mxu0 0
        %1138 = vmatpush1.bf16.msra.mxu0 0
        %1139 = vmatprep.subr.bf16.mxu0 0
        %1140 = vmatpush1.bf16.msra.mxu0 0
        %1141 = vmatprep.subr.bf16.mxu0 0
        %1142 = vmatpush1.bf16.msra.mxu0 0
        %1143 = vmatprep.subr.bf16.mxu0 0
        %1144 = vmatpush1.bf16.msra.mxu0 0
        %1145 = vmatprep.subr.bf16.mxu0 0
        %1146 = vmatpush1.bf16.msra.mxu0 0
        %1147 = vmatprep.subr.bf16.mxu0 0
        %1148 = vmatpush1.bf16.msra.mxu0 0
        %1149 = vmatprep.subr.bf16.mxu0 0
        %1150 = vmatpush1.bf16.msra.mxu0 0
        %1151 = vmatprep.subr.bf16.mxu0 0
        %1152 = vmatpush1.bf16.msra.mxu0 0
        %1153 = vmatprep.subr.bf16.mxu0 0
        %1154 = vmatpush1.bf16.msra.mxu0 0
        %1155 = vmatprep.subr.bf16.mxu0 0
        %1156 = vmatpush1.bf16.msra.mxu0 0
        %1157 = vmatprep.subr.bf16.mxu0 0
        %1158 = vmatpush1.bf16.msra.mxu0 0
        %1159 = vmatprep.mubr.bf16.mxu0 0
        %1160 = vmatmul.mubr.bf16.gmra.mrb[0].mxu0 %v1125
        %v1161 = vpop.f32.mrb[0].mxu0
        %v1162 = vadd.f32 %v1113, %v1161
        %v1163 = vpop.f32.mrb[0].mxu0
        %v1164 = vpop.f32.mrb[0].mxu0
        %v1165 = vpop.f32.mrb[0].mxu0
        %1166 = vdwg.mxu0
        %s1167 = scalar_lea.vmem %s4, 8
        %v1168 = vld [vmem:[%s1167] sm:$0xf]
        %v1170 = vsel %vm1016, %v1168, 0
        %1172 = vmatprep.subr.bf16.mxu0 0
        %1173 = vmatpush1.bf16.msra.mxu0 %v1022
        %1174 = vmatprep.subr.bf16.mxu0 0
        %1175 = vmatpush1.bf16.msra.mxu0 0
        %1176 = vmatprep.subr.bf16.mxu0 0
        %1177 = vmatpush1.bf16.msra.mxu0 0
        %1178 = vmatprep.subr.bf16.mxu0 0
        %1179 = vmatpush1.bf16.msra.mxu0 0
        %1180 = vmatprep.subr.bf16.mxu0 0
        %1181 = vmatpush1.bf16.msra.mxu0 0
        %1182 = vmatprep.subr.bf16.mxu0 0
        %1183 = vmatpush1.bf16.msra.mxu0 0
        %1184 = vmatprep.subr.bf16.mxu0 0
        %1185 = vmatpush1.bf16.msra.mxu0 0
        %1186 = vmatprep.subr.bf16.mxu0 0
        %1187 = vmatpush1.bf16.msra.mxu0 0
        %1188 = vmatprep.subr.bf16.mxu0 0
        %1189 = vmatpush1.bf16.msra.mxu0 0
        %1190 = vmatprep.subr.bf16.mxu0 0
        %1191 = vmatpush1.bf16.msra.mxu0 0
        %1192 = vmatprep.subr.bf16.mxu0 0
        %1193 = vmatpush1.bf16.msra.mxu0 0
        %1194 = vmatprep.subr.bf16.mxu0 0
        %1195 = vmatpush1.bf16.msra.mxu0 0
        %1196 = vmatprep.subr.bf16.mxu0 0
        %1197 = vmatpush1.bf16.msra.mxu0 0
        %1198 = vmatprep.subr.bf16.mxu0 0
        %1199 = vmatpush1.bf16.msra.mxu0 0
        %1200 = vmatprep.subr.bf16.mxu0 0
        %1201 = vmatpush1.bf16.msra.mxu0 0
        %1202 = vmatprep.subr.bf16.mxu0 0
        %1203 = vmatpush1.bf16.msra.mxu0 0
        %1204 = vmatprep.mubr.bf16.mxu0 0
        %1205 = vmatmul.mubr.bf16.gmra.mrb[0].mxu0 %v1170
        %v1206 = vpop.f32.mrb[0].mxu0
        %v1207 = vadd.f32 0.0, %v1206
        %v1208 = vpop.f32.mrb[0].mxu0
        %v1209 = vpop.f32.mrb[0].mxu0
        %v1210 = vpop.f32.mrb[0].mxu0
        %1211 = vdwg.mxu0
        %v1212 = vpack.c.bf16 %v1207, %v1207
        %s1213 = scalar_lea.vmem %s5, 16
        %v1214 = vld [vmem:[%s1213] sm:$0xf]
        %v1215 = vld [vmem:[%s1213 + $0x4] sm:$0xf]
        %v1218 = vunpack.c.l.b16 %v1214
        %v1219 = vunpack.c.l.b16 %v1215
        %v1220 = vpack.c.b16 %v1219, %v1218
        %v1223 = vsel %vm553, %v1212, 0
        %1225 = vmatprep.subr.bf16.mxu0 0
        %1226 = vmatpush1.bf16.msra.mxu0 %v1220
        %1227 = vmatprep.subr.bf16.mxu0 0
        %1228 = vmatpush1.bf16.msra.mxu0 0
        %1229 = vmatprep.subr.bf16.mxu0 0
        %1230 = vmatpush1.bf16.msra.mxu0 0
        %1231 = vmatprep.subr.bf16.mxu0 0
        %1232 = vmatpush1.bf16.msra.mxu0 0
        %1233 = vmatprep.subr.bf16.mxu0 0
        %1234 = vmatpush1.bf16.msra.mxu0 0
        %1235 = vmatprep.subr.bf16.mxu0 0
        %1236 = vmatpush1.bf16.msra.mxu0 0
        %1237 = vmatprep.subr.bf16.mxu0 0
        %1238 = vmatpush1.bf16.msra.mxu0 0
        %1239 = vmatprep.subr.bf16.mxu0 0
        %1240 = vmatpush1.bf16.msra.mxu0 0
        %1241 = vmatprep.subr.bf16.mxu0 0
        %1242 = vmatpush1.bf16.msra.mxu0 0
        %1243 = vmatprep.subr.bf16.mxu0 0
        %1244 = vmatpush1.bf16.msra.mxu0 0
        %1245 = vmatprep.subr.bf16.mxu0 0
        %1246 = vmatpush1.bf16.msra.mxu0 0
        %1247 = vmatprep.subr.bf16.mxu0 0
        %1248 = vmatpush1.bf16.msra.mxu0 0
        %1249 = vmatprep.subr.bf16.mxu0 0
        %1250 = vmatpush1.bf16.msra.mxu0 0
        %1251 = vmatprep.subr.bf16.mxu0 0
        %1252 = vmatpush1.bf16.msra.mxu0 0
        %1253 = vmatprep.subr.bf16.mxu0 0
        %1254 = vmatpush1.bf16.msra.mxu0 0
        %1255 = vmatprep.subr.bf16.mxu0 0
        %1256 = vmatpush1.bf16.msra.mxu0 0
        %1257 = vmatprep.mubr.bf16.mxu0 0
        %1258 = vmatmul.mubr.bf16.gmra.mrb[0].mxu0 %v1223
        %v1259 = vpop.f32.mrb[0].mxu0
        %v1260 = vadd.f32 0.0, %v1259
        %v1261 = vpop.f32.mrb[0].mxu0
        %v1262 = vpop.f32.mrb[0].mxu0
        %v1263 = vpop.f32.mrb[0].mxu0
        %1264 = vdwg.mxu0
        %v1265 = vadd.f32 %v1162, %v1260
        %v1266 = vld [vmem:[%s6] sm:$0x1]
        %v1268 = vlaneseq
        %v1269 = vshrl.u32 %v1268, 7
        %v1270 = vsub.s32 0, %v1269
        %v1271 = vrot.slane %v1266, %v1270
        %v1273 = vadd.f32 %v1265, %v1271
        %v1274 = vmax.f32 %v1273, 0.0
        %v1275 = vpack.c.bf16 %v1274, %v1274
        %v1276 = vld [vmem:[%s8] sm:$0xf]
        %v1277 = vld [vmem:[%s8 + $0x4] sm:$0xf]
        %v1278 = vld [vmem:[%s9] sm:$0x1]
        %v1280 = vlaneseq
        %v1281 = vshrl.u32 %v1280, 7
        %v1282 = vsub.s32 0, %v1281
        %v1283 = vrot.slane %v1278, %v1282
        %v1287 = vunpack.c.l.b16 %v1276
        %v1288 = vunpack.c.l.b16 %v1277
        %v1289 = vpack.c.b16 %v1288, %v1287
        %v1292 = vsel %vm553, %v1275, 0
        %1294 = vmatprep.subr.bf16.mxu0 0
        %1295 = vmatpush1.bf16.msra.mxu0 %v1289
        %1296 = vmatprep.subr.bf16.mxu0 0
        %1297 = vmatpush1.bf16.msra.mxu0 0
        %1298 = vmatprep.subr.bf16.mxu0 0
        %1299 = vmatpush1.bf16.msra.mxu0 0
        %1300 = vmatprep.subr.bf16.mxu0 0
        %1301 = vmatpush1.bf16.msra.mxu0 0
        %1302 = vmatprep.subr.bf16.mxu0 0
        %1303 = vmatpush1.bf16.msra.mxu0 0
        %1304 = vmatprep.subr.bf16.mxu0 0
        %1305 = vmatpush1.bf16.msra.mxu0 0
        %1306 = vmatprep.subr.bf16.mxu0 0
        %1307 = vmatpush1.bf16.msra.mxu0 0
        %1308 = vmatprep.subr.bf16.mxu0 0
        %1309 = vmatpush1.bf16.msra.mxu0 0
        %1310 = vmatprep.subr.bf16.mxu0 0
        %1311 = vmatpush1.bf16.msra.mxu0 0
        %1312 = vmatprep.subr.bf16.mxu0 0
        %1313 = vmatpush1.bf16.msra.mxu0 0
        %1314 = vmatprep.subr.bf16.mxu0 0
        %1315 = vmatpush1.bf16.msra.mxu0 0
        %1316 = vmatprep.subr.bf16.mxu0 0
        %1317 = vmatpush1.bf16.msra.mxu0 0
        %1318 = vmatprep.subr.bf16.mxu0 0
        %1319 = vmatpush1.bf16.msra.mxu0 0
        %1320 = vmatprep.subr.bf16.mxu0 0
        %1321 = vmatpush1.bf16.msra.mxu0 0
        %1322 = vmatprep.subr.bf16.mxu0 0
        %1323 = vmatpush1.bf16.msra.mxu0 0
        %1324 = vmatprep.subr.bf16.mxu0 0
        %1325 = vmatpush1.bf16.msra.mxu0 0
        %1326 = vmatprep.mubr.bf16.mxu0 0
        %1327 = vmatmul.mubr.bf16.gmra.mrb[0].mxu0 %v1292
        %v1328 = vpop.f32.mrb[0].mxu0
        %v1329 = vadd.f32 %v1283, %v1328
        %v1330 = vpop.f32.mrb[0].mxu0
        %v1331 = vpop.f32.mrb[0].mxu0
        %v1332 = vpop.f32.mrb[0].mxu0
        %1333 = vdwg.mxu0
        %v1334 = vld [vmem:[%s10] sm:$0xf]
        %v1336 = vsel %vm553, %v1334, 0
        %1338 = vmatprep.subr.bf16.mxu0 0
        %1339 = vmatpush1.bf16.msra.mxu0 %v551
        %1340 = vmatprep.subr.bf16.mxu0 0
        %1341 = vmatpush1.bf16.msra.mxu0 0
        %1342 = vmatprep.subr.bf16.mxu0 0
        %1343 = vmatpush1.bf16.msra.mxu0 0
        %1344 = vmatprep.subr.bf16.mxu0 0
        %1345 = vmatpush1.bf16.msra.mxu0 0
        %1346 = vmatprep.subr.bf16.mxu0 0
        %1347 = vmatpush1.bf16.msra.mxu0 0
        %1348 = vmatprep.subr.bf16.mxu0 0
        %1349 = vmatpush1.bf16.msra.mxu0 0
        %1350 = vmatprep.subr.bf16.mxu0 0
        %1351 = vmatpush1.bf16.msra.mxu0 0
        %1352 = vmatprep.subr.bf16.mxu0 0
        %1353 = vmatpush1.bf16.msra.mxu0 0
        %1354 = vmatprep.subr.bf16.mxu0 0
        %1355 = vmatpush1.bf16.msra.mxu0 0
        %1356 = vmatprep.subr.bf16.mxu0 0
        %1357 = vmatpush1.bf16.msra.mxu0 0
        %1358 = vmatprep.subr.bf16.mxu0 0
        %1359 = vmatpush1.bf16.msra.mxu0 0
        %1360 = vmatprep.subr.bf16.mxu0 0
        %1361 = vmatpush1.bf16.msra.mxu0 0
        %1362 = vmatprep.subr.bf16.mxu0 0
        %1363 = vmatpush1.bf16.msra.mxu0 0
        %1364 = vmatprep.subr.bf16.mxu0 0
        %1365 = vmatpush1.bf16.msra.mxu0 0
        %1366 = vmatprep.subr.bf16.mxu0 0
        %1367 = vmatpush1.bf16.msra.mxu0 0
        %1368 = vmatprep.subr.bf16.mxu0 0
        %1369 = vmatpush1.bf16.msra.mxu0 0
        %1370 = vmatprep.mubr.bf16.mxu0 0
        %1371 = vmatmul.mubr.bf16.gmra.mrb[0].mxu0 %v1336
        %v1372 = vpop.f32.mrb[0].mxu0
        %v1373 = vadd.f32 0.0, %v1372
        %v1374 = vpop.f32.mrb[0].mxu0
        %v1375 = vpop.f32.mrb[0].mxu0
        %v1376 = vpop.f32.mrb[0].mxu0
        %1377 = vdwg.mxu0
        %v1378 = vld [vmem:[%s11] sm:$0xf]
        %v1380 = vsel %vm553, %v1378, 0
        %1382 = vmatprep.subr.bf16.mxu0 0
        %1383 = vmatpush1.bf16.msra.mxu0 %v551
        %1384 = vmatprep.subr.bf16.mxu0 0
        %1385 = vmatpush1.bf16.msra.mxu0 0
        %1386 = vmatprep.subr.bf16.mxu0 0
        %1387 = vmatpush1.bf16.msra.mxu0 0
        %1388 = vmatprep.subr.bf16.mxu0 0
        %1389 = vmatpush1.bf16.msra.mxu0 0
        %1390 = vmatprep.subr.bf16.mxu0 0
        %1391 = vmatpush1.bf16.msra.mxu0 0
        %1392 = vmatprep.subr.bf16.mxu0 0
        %1393 = vmatpush1.bf16.msra.mxu0 0
        %1394 = vmatprep.subr.bf16.mxu0 0
        %1395 = vmatpush1.bf16.msra.mxu0 0
        %1396 = vmatprep.subr.bf16.mxu0 0
        %1397 = vmatpush1.bf16.msra.mxu0 0
        %1398 = vmatprep.subr.bf16.mxu0 0
        %1399 = vmatpush1.bf16.msra.mxu0 0
        %1400 = vmatprep.subr.bf16.mxu0 0
        %1401 = vmatpush1.bf16.msra.mxu0 0
        %1402 = vmatprep.subr.bf16.mxu0 0
        %1403 = vmatpush1.bf16.msra.mxu0 0
        %1404 = vmatprep.subr.bf16.mxu0 0
        %1405 = vmatpush1.bf16.msra.mxu0 0
        %1406 = vmatprep.subr.bf16.mxu0 0
        %1407 = vmatpush1.bf16.msra.mxu0 0
        %1408 = vmatprep.subr.bf16.mxu0 0
        %1409 = vmatpush1.bf16.msra.mxu0 0
        %1410 = vmatprep.subr.bf16.mxu0 0
        %1411 = vmatpush1.bf16.msra.mxu0 0
        %1412 = vmatprep.subr.bf16.mxu0 0
        %1413 = vmatpush1.bf16.msra.mxu0 0
        %1414 = vmatprep.mubr.bf16.mxu0 0
        %1415 = vmatmul.mubr.bf16.gmra.mrb[0].mxu0 %v1380
        %v1416 = vpop.f32.mrb[0].mxu0
        %v1417 = vadd.f32 0.0, %v1416
        %v1418 = vpop.f32.mrb[0].mxu0
        %v1419 = vpop.f32.mrb[0].mxu0
        %v1420 = vpop.f32.mrb[0].mxu0
        %1421 = vdwg.mxu0
        %v1422 = vmax.f32 %v1373, %v1417
        %v1423 = vpack.c.bf16 %v1422, %v1422
        %v1424 = vld [vmem:[%s12] sm:$0xf]
        %v1425 = vld [vmem:[%s12 + $0x4] sm:$0xf]
        %v1426 = vld [vmem:[%s12 + $0x8] sm:$0xf]
        %v1427 = vld [vmem:[%s12 + $0xc] sm:$0xf]
        %v1428 = vld [vmem:[%s12 + $0x10] sm:$0xf]
        %v1429 = vld [vmem:[%s12 + $0x14] sm:$0xf]
        %v1430 = vld [vmem:[%s12 + $0x18] sm:$0xf]
        %v1431 = vld [vmem:[%s12 + $0x1c] sm:$0xf]
        %v1432 = vld [vmem:[%s12 + $0x20] sm:$0xf]
        %v1433 = vld [vmem:[%s12 + $0x24] sm:$0xf]
        %v1434 = vld [vmem:[%s12 + $0x28] sm:$0xf]
        %v1435 = vld [vmem:[%s12 + $0x2c] sm:$0xf]
        %v1436 = vld [vmem:[%s12 + $0x30] sm:$0xf]
        %v1437 = vld [vmem:[%s12 + $0x34] sm:$0xf]
        %v1438 = vld [vmem:[%s12 + $0x38] sm:$0xf]
        %v1439 = vld [vmem:[%s12 + $0x3c] sm:$0xf]
        %v1456 = vunpack.c.l.b16 %v1424
        %v1457 = vunpack.c.l.b16 %v1425
        %v1458 = vunpack.c.l.b16 %v1426
        %v1459 = vunpack.c.l.b16 %v1427
        %v1460 = vunpack.c.l.b16 %v1428
        %v1461 = vunpack.c.l.b16 %v1429
        %v1462 = vunpack.c.l.b16 %v1430
        %v1463 = vunpack.c.l.b16 %v1431
        %v1464 = vunpack.c.l.b16 %v1432
        %v1465 = vunpack.c.l.b16 %v1433
        %v1466 = vunpack.c.l.b16 %v1434
        %v1467 = vunpack.c.l.b16 %v1435
        %v1468 = vunpack.c.l.b16 %v1436
        %v1469 = vunpack.c.l.b16 %v1437
        %v1470 = vunpack.c.l.b16 %v1438
        %v1471 = vunpack.c.l.b16 %v1439
        %v1472 = vpack.c.b16 %v1457, %v1456
        %v1473 = vpack.c.b16 %v1459, %v1458
        %v1474 = vpack.c.b16 %v1461, %v1460
        %v1475 = vpack.c.b16 %v1463, %v1462
        %v1476 = vpack.c.b16 %v1465, %v1464
        %v1477 = vpack.c.b16 %v1467, %v1466
        %v1478 = vpack.c.b16 %v1469, %v1468
        %v1479 = vpack.c.b16 %v1471, %v1470
        %1488 = vmatprep.subr.bf16.mxu0 0
        %1489 = vmatpush1.bf16.msra.mxu0 %v1472
        %1490 = vmatprep.subr.bf16.mxu0 0
        %1491 = vmatpush1.bf16.msra.mxu0 %v1473
        %1492 = vmatprep.subr.bf16.mxu0 0
        %1493 = vmatpush1.bf16.msra.mxu0 %v1474
        %1494 = vmatprep.subr.bf16.mxu0 0
        %1495 = vmatpush1.bf16.msra.mxu0 %v1475
        %1496 = vmatprep.subr.bf16.mxu0 0
        %1497 = vmatpush1.bf16.msra.mxu0 %v1476
        %1498 = vmatprep.subr.bf16.mxu0 0
        %1499 = vmatpush1.bf16.msra.mxu0 %v1477
        %1500 = vmatprep.subr.bf16.mxu0 0
        %1501 = vmatpush1.bf16.msra.mxu0 %v1478
        %1502 = vmatprep.subr.bf16.mxu0 0
        %1503 = vmatpush1.bf16.msra.mxu0 %v1479
        %1504 = vmatprep.subr.bf16.mxu0 0
        %1505 = vmatpush1.bf16.msra.mxu0 0
        %1506 = vmatprep.subr.bf16.mxu0 0
        %1507 = vmatpush1.bf16.msra.mxu0 0
        %1508 = vmatprep.subr.bf16.mxu0 0
        %1509 = vmatpush1.bf16.msra.mxu0 0
        %1510 = vmatprep.subr.bf16.mxu0 0
        %1511 = vmatpush1.bf16.msra.mxu0 0
        %1512 = vmatprep.subr.bf16.mxu0 0
        %1513 = vmatpush1.bf16.msra.mxu0 0
        %1514 = vmatprep.subr.bf16.mxu0 0
        %1515 = vmatpush1.bf16.msra.mxu0 0
        %1516 = vmatprep.subr.bf16.mxu0 0
        %1517 = vmatpush1.bf16.msra.mxu0 0
        %1518 = vmatprep.subr.bf16.mxu0 0
        %1519 = vmatpush1.bf16.msra.mxu0 0
        %1520 = vmatprep.mubr.bf16.mxu0 0
        %1521 = vmatmul.mubr.bf16.gmra.mrb[0].mxu0 %v1423
        %v1522 = vpop.f32.mrb[0].mxu0
        %v1523 = vadd.f32 0.0, %v1522
        %v1524 = vpop.f32.mrb[0].mxu0
        %v1525 = vpop.f32.mrb[0].mxu0
        %v1526 = vpop.f32.mrb[0].mxu0
        %1527 = vdwg.mxu0
        %v1528 = vld [vmem:[%s13] sm:$0xf]
        %v1529 = vld [vmem:[%s13 + $0x4] sm:$0xf]
        %v1530 = vld [vmem:[%s13 + $0x8] sm:$0xf]
        %v1531 = vld [vmem:[%s13 + $0xc] sm:$0xf]
        %v1532 = vld [vmem:[%s13 + $0x10] sm:$0xf]
        %v1533 = vld [vmem:[%s13 + $0x14] sm:$0xf]
        %v1534 = vld [vmem:[%s13 + $0x18] sm:$0xf]
        %v1535 = vld [vmem:[%s13 + $0x1c] sm:$0xf]
        %v1536 = vld [vmem:[%s13 + $0x20] sm:$0xf]
        %v1537 = vld [vmem:[%s13 + $0x24] sm:$0xf]
        %v1538 = vld [vmem:[%s13 + $0x28] sm:$0xf]
        %v1539 = vld [vmem:[%s13 + $0x2c] sm:$0xf]
        %v1540 = vld [vmem:[%s13 + $0x30] sm:$0xf]
        %v1541 = vld [vmem:[%s13 + $0x34] sm:$0xf]
        %v1542 = vld [vmem:[%s13 + $0x38] sm:$0xf]
        %v1543 = vld [vmem:[%s13 + $0x3c] sm:$0xf]
        %v1560 = vunpack.c.l.b16 %v1528
        %v1561 = vunpack.c.l.b16 %v1529
        %v1562 = vunpack.c.l.b16 %v1530
        %v1563 = vunpack.c.l.b16 %v1531
        %v1564 = vunpack.c.l.b16 %v1532
        %v1565 = vunpack.c.l.b16 %v1533
        %v1566 = vunpack.c.l.b16 %v1534
        %v1567 = vunpack.c.l.b16 %v1535
        %v1568 = vunpack.c.l.b16 %v1536
        %v1569 = vunpack.c.l.b16 %v1537
        %v1570 = vunpack.c.l.b16 %v1538
        %v1571 = vunpack.c.l.b16 %v1539
        %v1572 = vunpack.c.l.b16 %v1540
        %v1573 = vunpack.c.l.b16 %v1541
        %v1574 = vunpack.c.l.b16 %v1542
        %v1575 = vunpack.c.l.b16 %v1543
        %v1576 = vpack.c.b16 %v1561, %v1560
        %v1577 = vpack.c.b16 %v1563, %v1562
        %v1578 = vpack.c.b16 %v1565, %v1564
        %v1579 = vpack.c.b16 %v1567, %v1566
        %v1580 = vpack.c.b16 %v1569, %v1568
        %v1581 = vpack.c.b16 %v1571, %v1570
        %v1582 = vpack.c.b16 %v1573, %v1572
        %v1583 = vpack.c.b16 %v1575, %v1574
        %1592 = vmatprep.subr.bf16.mxu0 0
        %1593 = vmatpush1.bf16.msra.mxu0 %v1576
        %1594 = vmatprep.subr.bf16.mxu0 0
        %1595 = vmatpush1.bf16.msra.mxu0 %v1577
        %1596 = vmatprep.subr.bf16.mxu0 0
        %1597 = vmatpush1.bf16.msra.mxu0 %v1578
        %1598 = vmatprep.subr.bf16.mxu0 0
        %1599 = vmatpush1.bf16.msra.mxu0 %v1579
        %1600 = vmatprep.subr.bf16.mxu0 0
        %1601 = vmatpush1.bf16.msra.mxu0 %v1580
        %1602 = vmatprep.subr.bf16.mxu0 0
        %1603 = vmatpush1.bf16.msra.mxu0 %v1581
        %1604 = vmatprep.subr.bf16.mxu0 0
        %1605 = vmatpush1.bf16.msra.mxu0 %v1582
        %1606 = vmatprep.subr.bf16.mxu0 0
        %1607 = vmatpush1.bf16.msra.mxu0 %v1583
        %1608 = vmatprep.subr.bf16.mxu0 0
        %1609 = vmatpush1.bf16.msra.mxu0 0
        %1610 = vmatprep.subr.bf16.mxu0 0
        %1611 = vmatpush1.bf16.msra.mxu0 0
        %1612 = vmatprep.subr.bf16.mxu0 0
        %1613 = vmatpush1.bf16.msra.mxu0 0
        %1614 = vmatprep.subr.bf16.mxu0 0
        %1615 = vmatpush1.bf16.msra.mxu0 0
        %1616 = vmatprep.subr.bf16.mxu0 0
        %1617 = vmatpush1.bf16.msra.mxu0 0
        %1618 = vmatprep.subr.bf16.mxu0 0
        %1619 = vmatpush1.bf16.msra.mxu0 0
        %1620 = vmatprep.subr.bf16.mxu0 0
        %1621 = vmatpush1.bf16.msra.mxu0 0
        %1622 = vmatprep.subr.bf16.mxu0 0
        %1623 = vmatpush1.bf16.msra.mxu0 0
        %1624 = vmatprep.mubr.bf16.mxu0 0
        %1625 = vmatmul.mubr.bf16.gmra.mrb[0].mxu0 %v1423
        %v1626 = vpop.f32.mrb[0].mxu0
        %v1627 = vadd.f32 0.0, %v1626
        %v1628 = vpop.f32.mrb[0].mxu0
        %v1629 = vpop.f32.mrb[0].mxu0
        %v1630 = vpop.f32.mrb[0].mxu0
        %1631 = vdwg.mxu0
        %v1632 = vmax.f32 %v1523, %v1627
        %v1633 = vpack.c.bf16 %v1632, %v1632
        %v1634 = vld [vmem:[%s14] sm:$0xf]
        %v1635 = vld [vmem:[%s14 + $0x4] sm:$0xf]
        %v1636 = vld [vmem:[%s14 + $0x8] sm:$0xf]
        %v1637 = vld [vmem:[%s14 + $0xc] sm:$0xf]
        %v1638 = vld [vmem:[%s14 + $0x10] sm:$0xf]
        %v1639 = vld [vmem:[%s14 + $0x14] sm:$0xf]
        %v1640 = vld [vmem:[%s14 + $0x18] sm:$0xf]
        %v1641 = vld [vmem:[%s14 + $0x1c] sm:$0xf]
        %v1642 = vld [vmem:[%s15] sm:$0x1]
        %v1644 = vlaneseq
        %v1645 = vshrl.u32 %v1644, 7
        %v1646 = vsub.s32 0, %v1645
        %v1647 = vrot.slane %v1642, %v1646
        %v1657 = vunpack.c.l.b16 %v1634
        %v1658 = vunpack.c.l.b16 %v1635
        %v1659 = vunpack.c.l.b16 %v1636
        %v1660 = vunpack.c.l.b16 %v1637
        %v1661 = vunpack.c.l.b16 %v1638
        %v1662 = vunpack.c.l.b16 %v1639
        %v1663 = vunpack.c.l.b16 %v1640
        %v1664 = vunpack.c.l.b16 %v1641
        %v1665 = vpack.c.b16 %v1658, %v1657
        %v1666 = vpack.c.b16 %v1660, %v1659
        %v1667 = vpack.c.b16 %v1662, %v1661
        %v1668 = vpack.c.b16 %v1664, %v1663
        %vm1673 = vcmask 523264
        %v1675 = vsel %vm1673, %v1633, 0
        %1677 = vmatprep.subr.bf16.mxu0 0
        %1678 = vmatpush1.bf16.msra.mxu0 %v1665
        %1679 = vmatprep.subr.bf16.mxu0 0
        %1680 = vmatpush1.bf16.msra.mxu0 %v1666
        %1681 = vmatprep.subr.bf16.mxu0 0
        %1682 = vmatpush1.bf16.msra.mxu0 %v1667
        %1683 = vmatprep.subr.bf16.mxu0 0
        %1684 = vmatpush1.bf16.msra.mxu0 %v1668
        %1685 = vmatprep.subr.bf16.mxu0 0
        %1686 = vmatpush1.bf16.msra.mxu0 0
        %1687 = vmatprep.subr.bf16.mxu0 0
        %1688 = vmatpush1.bf16.msra.mxu0 0
        %1689 = vmatprep.subr.bf16.mxu0 0
        %1690 = vmatpush1.bf16.msra.mxu0 0
        %1691 = vmatprep.subr.bf16.mxu0 0
        %1692 = vmatpush1.bf16.msra.mxu0 0
        %1693 = vmatprep.subr.bf16.mxu0 0
        %1694 = vmatpush1.bf16.msra.mxu0 0
        %1695 = vmatprep.subr.bf16.mxu0 0
        %1696 = vmatpush1.bf16.msra.mxu0 0
        %1697 = vmatprep.subr.bf16.mxu0 0
        %1698 = vmatpush1.bf16.msra.mxu0 0
        %1699 = vmatprep.subr.bf16.mxu0 0
        %1700 = vmatpush1.bf16.msra.mxu0 0
        %1701 = vmatprep.subr.bf16.mxu0 0
        %1702 = vmatpush1.bf16.msra.mxu0 0
        %1703 = vmatprep.subr.bf16.mxu0 0
        %1704 = vmatpush1.bf16.msra.mxu0 0
        %1705 = vmatprep.subr.bf16.mxu0 0
        %1706 = vmatpush1.bf16.msra.mxu0 0
        %1707 = vmatprep.subr.bf16.mxu0 0
        %1708 = vmatpush1.bf16.msra.mxu0 0
        %1709 = vmatprep.mubr.bf16.mxu0 0
        %1710 = vmatmul.mubr.bf16.gmra.mrb[0].mxu0 %v1675
        %v1711 = vpop.f32.mrb[0].mxu0
        %v1712 = vadd.f32 %v1647, %v1711
        %v1713 = vpop.f32.mrb[0].mxu0
        %v1714 = vpop.f32.mrb[0].mxu0
        %v1715 = vpop.f32.mrb[0].mxu0
        %1716 = vdwg.mxu0
        %v1717 = vmax.f32 %v1712, 0.0
        %v1718 = vadd.f32 %v1717, %v1329
        %s1719 = sld [smem:[#allocation2]]
        %vm1720 = vcmp.ge.f32.partialorder %v1718, 0.0
        %v1721 = vstv %s1719
        %v1722 = vmul.f32 %v1721, %v1718
        %v1723 = vsel %vm1720, %v1718, %v1722
        %1724 = vst [vmem:[%s542] sm:$0xff] %v1723
        %s1725 = sand.u32 %s402, 1
        %s1726 = scalar_lea.sflag [#allocation4], %s1725
        %s1727 = sand.u32 %s402, 1
        %s1728 = smul.addr %s1727, 8
        %s1729 = scalar_lea.vmem [#allocation3], %s1728
        // Predicated region
        $region89: #{tpu_custom_call.1} parent=87 // pred_check
          %p1730 = pneg %p412
        $region90: #{tpu_custom_call.1} parent=87 // pred_check_branch
          %1732 = sbr.rel (%p1730) target = $region92
        $region91: #{tpu_custom_call.1} parent=87 // pred_region
          %s1734 = ssub.s32 128, 128
          %1735 = vsyncadd %s1726, %s1734
          %s1736 = smul.addr %s32, 128
          %s1737 = scalar_lea.hbm %s17, %s1736
          %s1739 = sshll.u32 %s1729, 4
          %s1740 = int_to_ptr.vmem [resolvable:$true] %s1739
          %1742 = dma.vmem_to_hbm [thread:$0]  %s1740, 128, %s1737, %s1726
        $region92: #{tpu_custom_call.1} parent=87 // pred_fallthru
          _
      $region88: #{tpu_custom_call.1} parent=5 // pred_fallthru
        _
      %p1743 = scmp.le.s32.totalorder 2, %s27
      // Predicated region
      $region93: #{tpu_custom_call.1} parent=5 // pred_check
        %p1744 = pneg %p1743
      $region94: #{tpu_custom_call.1} parent=5 // pred_check_branch
        %1746 = sbr.rel (%p1744) target = $region96
      $region95: #{tpu_custom_call.1} parent=5 // pred_region
        %s1747 = ssub.s32 %s27, 2
        // Predicated region
        $region97: #{tpu_custom_call.1} parent=95 // pred_check
          %p1748 = pneg %p418
        $region98: #{tpu_custom_call.1} parent=95 // pred_check_branch
          %1750 = sbr.rel (%p1748) target = $region100
        $region99: #{tpu_custom_call.1} parent=95 // pred_region
          %s1751 = sand.u32 %s403, 1
          %s1752 = scalar_lea.sflag [#allocation4], %s1751
          %s1753 = sand.u32 %s403, 1
          %s1754 = smul.addr %s1753, 8
          %s1755 = scalar_lea.vmem [#allocation3], %s1754
          %1756 = dma.done %s1752, 128
        $region100: #{tpu_custom_call.1} parent=95 // pred_fallthru
          _
      $region96: #{tpu_custom_call.1} parent=5 // pred_fallthru
        _
    $region6: #{tpu_custom_call.1} parent=1 // loop_footer
      %s31 = sadd.s32 1, %s27
    $region7: #{tpu_custom_call.1} parent=1 // loop_footer_branch
      %26 = sbr.rel target = $region3
    $region8: #{tpu_custom_call.1} parent=1 // loop_exit
      _
    %1757 = vsyncpa [#allocation4], 1
    %s1758 = scalar_lea.sflag [#allocation4], 1
    %1759 = vsyncpa %s1758, 1

</llo_original>
